<compile_context>
chip_gen: v5e
topology: v5e:2x2
jax: 0.10.0
libtpu: 0.0.40
codegen_flags: <defaults>
</compile_context>

<pallas_src>
import functools

import numpy as np
import jax
import jax.numpy as jnp
from jax import lax
from jax.experimental import pallas as pl
from jax.experimental.pallas import tpu as pltpu


def _round_up(v, m):
    return (v + m - 1) // m * m


def _conv_bn_relu_kernel(x_ref, w_ref, scale_ref, bias_ref, o_ref, *,
                         ksize, row_len, rows_per_block):
    """One (batch, cout-block, row-block) tile of fused conv + BN + ReLU.

    x_ref:     (1, 1, (rows_per_block + ksize) * row_len, Cin_p) bf16
               halo rows of the zero-padded NHWC image, flattened over
               (row, col) so each tap is a contiguous 2-D slice.
    w_ref:     (ksize, ksize, Cin_p, block_c) bf16 conv weight (HWIO).
    scale_ref: (1, block_c) f32   gamma / sqrt(var + eps)
    bias_ref:  (1, block_c) f32   beta - mean*scale (+ conv_bias*scale)
    o_ref:     (1, 1, rows_per_block * row_len, block_c) output tile.
    """
    m = rows_per_block * row_len
    x = x_ref[0, 0]                                   # ((bh+K)*row_len, Cin_p)
    acc = None
    for kh in range(ksize):
        for kw in range(ksize):
            start = kh * row_len + kw
            a = x[start:start + m, :]                 # (m, Cin_p), 2-D slice
            tap = jnp.dot(a, w_ref[kh, kw],           # (m, block_c) f32 on MXU
                          preferred_element_type=jnp.float32)
            acc = tap if acc is None else acc + tap
    y = acc * scale_ref[...] + bias_ref[...]          # f32 BN epilogue
    o_ref[0, 0] = jnp.maximum(y, 0.0).astype(o_ref.dtype)


def conv_norm_act(x_nchw, weight_oihw, gamma, beta, running_mean, running_var,
                  conv_bias=None, eps=1e-5, block_rows=512, block_cout=256,
                  out_dtype=None, vmem_limit_bytes=None):
    """Forward pass of ConvNormAct (inference BN, ReLU, Identity extras).

    x_nchw:      (N, Cin, H, W)    float32 (PyTorch layout)
    weight_oihw: (Cout, Cin, K, K) conv weight (PyTorch layout)
    returns:     (N, Cout, H, W)   out_dtype (default: x dtype)
    """
    N, Cin, H, W = x_nchw.shape
    Cout, Cin_w, K, K2 = weight_oihw.shape
    assert Cin_w == Cin and K2 == K
    assert K % 2 == 1, "module uses padding = K//2 ('same'); odd K assumed"
    pad = K // 2
    out_dtype = x_nchw.dtype if out_dtype is None else out_dtype

    # ---- fold BatchNorm (inference); scale/bias stay in f32 (epilogue) ----
    scale = gamma / jnp.sqrt(running_var + eps)                      # (Cout,)
    bias = beta - running_mean * scale                               # (Cout,)
    if conv_bias is not None:
        bias = bias + conv_bias * scale

    # ---- layout: NCHW -> NHWC, cast to bf16 BEFORE any expansion ----
    x = jnp.transpose(x_nchw, (0, 2, 3, 1)).astype(jnp.bfloat16)     # (N,H,W,Cin)

    Cin_p = max(8, _round_up(Cin, 8))          # sublane-friendly contraction dim
    row_len = W + 2 * pad                      # padded row length (junk cols cropped later)

    # Row-block size: target ~block_rows GEMM rows per grid step (review: 512).
    bh = max(1, min(H, block_rows // row_len))
    nb = -(-H // bh)
    Hp = nb * bh

    # Spatial zero-pad: 'same' pad + round H up to nb*bh + one extra halo row.
    x = jnp.pad(x, ((0, 0),
                    (pad, pad + (Hp - H) + 1),
                    (pad, pad),
                    (0, Cin_p - Cin)))          # (N, Hp+2p+1, row_len, Cin_p)

    # Halo row-blocks: block b holds padded rows [b*bh, b*bh + bh + K), flattened
    # over (row, col).  Activation bytes ~1x (+ halo), vs. K^2 x for im2col.
    row_idx = np.arange(nb)[:, None] * bh + np.arange(bh + K)[None, :]
    xb = x[:, row_idx]                          # (N, nb, bh+K, row_len, Cin_p)
    xb = xb.reshape(N, nb, (bh + K) * row_len, Cin_p)

    # Weight: OIHW -> HWIO, bf16, pad Cin/Cout for lane-dense MXU tiles.
    Cp = _round_up(Cout, 128)
    bc = 128
    for cand in range(_round_up(block_cout, 128), 127, -128):
        if Cp % cand == 0:
            bc = cand
            break
    w = jnp.transpose(weight_oihw, (2, 3, 1, 0)).astype(jnp.bfloat16)
    w = jnp.pad(w, ((0, 0), (0, 0), (0, Cin_p - Cin), (0, Cp - Cout)))

    scale_p = jnp.pad(scale.astype(jnp.float32)[None, :], ((0, 0), (0, Cp - Cout)))
    bias_p = jnp.pad(bias.astype(jnp.float32)[None, :], ((0, 0), (0, Cp - Cout)))

    m_blk = bh * row_len
    grid = (N, Cp // bc, nb)                    # all independent output tiles

    kernel = functools.partial(_conv_bn_relu_kernel, ksize=K, row_len=row_len,
                               rows_per_block=bh)

    compiler_kwargs = dict(dimension_semantics=("parallel", "parallel", "parallel"))
    if vmem_limit_bytes is not None:            # raise on v5e / v7x for big layers
        compiler_kwargs["vmem_limit_bytes"] = vmem_limit_bytes

    out = pl.pallas_call(
        kernel,
        out_shape=jax.ShapeDtypeStruct((N, nb, m_blk, Cp), out_dtype),
        grid=grid,
        in_specs=[
            # halo image block: changes every step (pipelined).
            pl.BlockSpec((1, 1, (bh + K) * row_len, Cin_p),
                         lambda n, c, b: (n, b, 0, 0)),
            # weight/scale/bias: constant across the innermost row-block axis ->
            # fetched only when the Cout block changes; Cout tiling bounds the
            # per-step weight VMEM footprint.
            pl.BlockSpec((K, K, Cin_p, bc), lambda n, c, b: (0, 0, 0, c)),
            pl.BlockSpec((1, bc), lambda n, c, b: (0, c)),
            pl.BlockSpec((1, bc), lambda n, c, b: (0, c)),
        ],
        out_specs=pl.BlockSpec((1, 1, m_blk, bc), lambda n, c, b: (n, b, 0, c)),
        compiler_params=pltpu.CompilerParams(**compiler_kwargs),
    )(xb, w, scale_p, bias_p)

    # (N, nb, bh*row_len, Cp) -> (N, Hp, row_len, Cp) -> crop pad/junk -> NCHW.
    y = out.reshape(N, Hp, row_len, Cp)[:, :H, :W, :Cout]
    return jnp.transpose(y, (0, 3, 1, 2))


def _reference(x_nchw, weight_oihw, gamma, beta, running_mean, running_var,
               eps=1e-5):
    """Pure-JAX f32 reference for correctness checking."""
    pad = weight_oihw.shape[-1] // 2
    y = lax.conv_general_dilated(
        x_nchw, weight_oihw, window_strides=(1, 1),
        padding=((pad, pad), (pad, pad)),
        dimension_numbers=("NCHW", "OIHW", "NCHW"))
    inv = 1.0 / jnp.sqrt(running_var + eps)
    y = (y - running_mean[None, :, None, None]) * inv[None, :, None, None]
    y = y * gamma[None, :, None, None] + beta[None, :, None, None]
    return jnp.maximum(y, 0.0)


if __name__ == "__main__":
    key = jax.random.PRNGKey(0)
    k_x, k_w, k_g, k_b, k_m, k_v = jax.random.split(key, 6)

    N, Cin, Cout, H, W, K = 2, 4, 8, 16, 16, 3

    x = jax.random.normal(k_x, (N, Cin, H, W), dtype=jnp.float32)
    weight = jax.random.normal(k_w, (Cout, Cin, K, K), dtype=jnp.float32) * 0.1
    gamma = jax.random.normal(k_g, (Cout,), dtype=jnp.float32) * 0.1 + 1.0
    beta = jax.random.normal(k_b, (Cout,), dtype=jnp.float32) * 0.1
    running_mean = jax.random.normal(k_m, (Cout,), dtype=jnp.float32) * 0.1
    running_var = jax.random.uniform(k_v, (Cout,), dtype=jnp.float32,
                                     minval=0.5, maxval=1.5)

    fwd = jax.jit(conv_norm_act)
    out = jax.block_until_ready(fwd(x, weight, gamma, beta, running_mean,
                                    running_var))

    ref = _reference(x, weight, gamma, beta, running_mean, running_var)
    assert out.shape == (N, Cout, H, W)
    # bf16 MXU inputs with f32 accumulation and f32 BN epilogue.
    assert jnp.allclose(out, ref, atol=5e-2, rtol=5e-2), "mismatch vs reference"

    print("KERNEL_OK")
</pallas_src>

<mosaic_0001>
module attributes {stable_mosaic.version = 11 : i64} {
  func.func @_conv_bn_relu_kernel(%arg0: i32, %arg1: i32, %arg2: i32, %arg3: memref<1x1x342x8xbf16, #tpu.memory_space<vmem>>, %arg4: memref<3x3x8x128xbf16, #tpu.memory_space<vmem>>, %arg5: memref<1x128xf32, #tpu.memory_space<vmem>>, %arg6: memref<1x128xf32, #tpu.memory_space<vmem>>, %arg7: memref<1x1x288x128xf32, #tpu.memory_space<vmem>>) attributes {dimension_semantics = [#tpu.dimension_semantics<parallel>, #tpu.dimension_semantics<parallel>, #tpu.dimension_semantics<parallel>], iteration_bounds = array<i64: 2, 1, 1>, scalar_prefetch = 0 : i64, scratch_operands = 0 : i64, tpu.core_type = #tpu.core_type<tc>, window_params = [{transform_indices = @transform_0, window_bounds = array<i64: 1, 1, 342, 8>}, {transform_indices = @transform_1, window_bounds = array<i64: 3, 3, 8, 128>}, {transform_indices = @transform_2, window_bounds = array<i64: 1, 128>}, {transform_indices = @transform_3, window_bounds = array<i64: 1, 128>}, {transform_indices = @transform_4, window_bounds = array<i64: 1, 1, 288, 128>}]} {
    %c0 = arith.constant 0 : index
    %c0_0 = arith.constant 0 : index
    %c0_1 = arith.constant 0 : index
    %c0_2 = arith.constant 0 : index
    %0 = vector.load %arg3[%c0, %c0_0, %c0_1, %c0_2] : memref<1x1x342x8xbf16, #tpu.memory_space<vmem>>, vector<1x1x342x8xbf16>
    %1 = vector.shape_cast %0 : vector<1x1x342x8xbf16> to vector<342x8xbf16>
    %2 = vector.extract_strided_slice %1 {offsets = [0, 0], sizes = [288, 8], strides = [1, 1]} : vector<342x8xbf16> to vector<288x8xbf16>
    %c0_3 = arith.constant 0 : index
    %c0_4 = arith.constant 0 : index
    %c0_5 = arith.constant 0 : index
    %c0_6 = arith.constant 0 : index
    %3 = vector.load %arg4[%c0_3, %c0_4, %c0_5, %c0_6] : memref<3x3x8x128xbf16, #tpu.memory_space<vmem>>, vector<1x1x8x128xbf16>
    %4 = vector.shape_cast %3 : vector<1x1x8x128xbf16> to vector<8x128xbf16>
    %cst = arith.constant dense<0.000000e+00> : vector<288x128xf32>
    %5 = tpu.matmul %2, %4, %cst {dimension_numbers = #tpu.dot_dimension_numbers<[1], [0], [0], [1], [0, 0, 1, 1], [], []>} : vector<288x8xbf16>, vector<8x128xbf16>, vector<288x128xf32> -> vector<288x128xf32>
    %6 = vector.extract_strided_slice %1 {offsets = [1, 0], sizes = [288, 8], strides = [1, 1]} : vector<342x8xbf16> to vector<288x8xbf16>
    %c0_7 = arith.constant 0 : index
    %c1 = arith.constant 1 : index
    %c0_8 = arith.constant 0 : index
    %c0_9 = arith.constant 0 : index
    %7 = vector.load %arg4[%c0_7, %c1, %c0_8, %c0_9] : memref<3x3x8x128xbf16, #tpu.memory_space<vmem>>, vector<1x1x8x128xbf16>
    %8 = vector.shape_cast %7 : vector<1x1x8x128xbf16> to vector<8x128xbf16>
    %cst_10 = arith.constant dense<0.000000e+00> : vector<288x128xf32>
    %9 = tpu.matmul %6, %8, %cst_10 {dimension_numbers = #tpu.dot_dimension_numbers<[1], [0], [0], [1], [0, 0, 1, 1], [], []>} : vector<288x8xbf16>, vector<8x128xbf16>, vector<288x128xf32> -> vector<288x128xf32>
    %10 = arith.addf %5, %9 : vector<288x128xf32>
    %11 = vector.extract_strided_slice %1 {offsets = [2, 0], sizes = [288, 8], strides = [1, 1]} : vector<342x8xbf16> to vector<288x8xbf16>
    %c0_11 = arith.constant 0 : index
    %c2 = arith.constant 2 : index
    %c0_12 = arith.constant 0 : index
    %c0_13 = arith.constant 0 : index
    %12 = vector.load %arg4[%c0_11, %c2, %c0_12, %c0_13] : memref<3x3x8x128xbf16, #tpu.memory_space<vmem>>, vector<1x1x8x128xbf16>
    %13 = vector.shape_cast %12 : vector<1x1x8x128xbf16> to vector<8x128xbf16>
    %cst_14 = arith.constant dense<0.000000e+00> : vector<288x128xf32>
    %14 = tpu.matmul %11, %13, %cst_14 {dimension_numbers = #tpu.dot_dimension_numbers<[1], [0], [0], [1], [0, 0, 1, 1], [], []>} : vector<288x8xbf16>, vector<8x128xbf16>, vector<288x128xf32> -> vector<288x128xf32>
    %15 = arith.addf %10, %14 : vector<288x128xf32>
    %16 = vector.extract_strided_slice %1 {offsets = [18, 0], sizes = [288, 8], strides = [1, 1]} : vector<342x8xbf16> to vector<288x8xbf16>
    %c1_15 = arith.constant 1 : index
    %c0_16 = arith.constant 0 : index
    %c0_17 = arith.constant 0 : index
    %c0_18 = arith.constant 0 : index
    %17 = vector.load %arg4[%c1_15, %c0_16, %c0_17, %c0_18] : memref<3x3x8x128xbf16, #tpu.memory_space<vmem>>, vector<1x1x8x128xbf16>
    %18 = vector.shape_cast %17 : vector<1x1x8x128xbf16> to vector<8x128xbf16>
    %cst_19 = arith.constant dense<0.000000e+00> : vector<288x128xf32>
    %19 = tpu.matmul %16, %18, %cst_19 {dimension_numbers = #tpu.dot_dimension_numbers<[1], [0], [0], [1], [0, 0, 1, 1], [], []>} : vector<288x8xbf16>, vector<8x128xbf16>, vector<288x128xf32> -> vector<288x128xf32>
    %20 = arith.addf %15, %19 : vector<288x128xf32>
    %21 = vector.extract_strided_slice %1 {offsets = [19, 0], sizes = [288, 8], strides = [1, 1]} : vector<342x8xbf16> to vector<288x8xbf16>
    %c1_20 = arith.constant 1 : index
    %c1_21 = arith.constant 1 : index
    %c0_22 = arith.constant 0 : index
    %c0_23 = arith.constant 0 : index
    %22 = vector.load %arg4[%c1_20, %c1_21, %c0_22, %c0_23] : memref<3x3x8x128xbf16, #tpu.memory_space<vmem>>, vector<1x1x8x128xbf16>
    %23 = vector.shape_cast %22 : vector<1x1x8x128xbf16> to vector<8x128xbf16>
    %cst_24 = arith.constant dense<0.000000e+00> : vector<288x128xf32>
    %24 = tpu.matmul %21, %23, %cst_24 {dimension_numbers = #tpu.dot_dimension_numbers<[1], [0], [0], [1], [0, 0, 1, 1], [], []>} : vector<288x8xbf16>, vector<8x128xbf16>, vector<288x128xf32> -> vector<288x128xf32>
    %25 = arith.addf %20, %24 : vector<288x128xf32>
    %26 = vector.extract_strided_slice %1 {offsets = [20, 0], sizes = [288, 8], strides = [1, 1]} : vector<342x8xbf16> to vector<288x8xbf16>
    %c1_25 = arith.constant 1 : index
    %c2_26 = arith.constant 2 : index
    %c0_27 = arith.constant 0 : index
    %c0_28 = arith.constant 0 : index
    %27 = vector.load %arg4[%c1_25, %c2_26, %c0_27, %c0_28] : memref<3x3x8x128xbf16, #tpu.memory_space<vmem>>, vector<1x1x8x128xbf16>
    %28 = vector.shape_cast %27 : vector<1x1x8x128xbf16> to vector<8x128xbf16>
    %cst_29 = arith.constant dense<0.000000e+00> : vector<288x128xf32>
    %29 = tpu.matmul %26, %28, %cst_29 {dimension_numbers = #tpu.dot_dimension_numbers<[1], [0], [0], [1], [0, 0, 1, 1], [], []>} : vector<288x8xbf16>, vector<8x128xbf16>, vector<288x128xf32> -> vector<288x128xf32>
    %30 = arith.addf %25, %29 : vector<288x128xf32>
    %31 = vector.extract_strided_slice %1 {offsets = [36, 0], sizes = [288, 8], strides = [1, 1]} : vector<342x8xbf16> to vector<288x8xbf16>
    %c2_30 = arith.constant 2 : index
    %c0_31 = arith.constant 0 : index
    %c0_32 = arith.constant 0 : index
    %c0_33 = arith.constant 0 : index
    %32 = vector.load %arg4[%c2_30, %c0_31, %c0_32, %c0_33] : memref<3x3x8x128xbf16, #tpu.memory_space<vmem>>, vector<1x1x8x128xbf16>
    %33 = vector.shape_cast %32 : vector<1x1x8x128xbf16> to vector<8x128xbf16>
    %cst_34 = arith.constant dense<0.000000e+00> : vector<288x128xf32>
    %34 = tpu.matmul %31, %33, %cst_34 {dimension_numbers = #tpu.dot_dimension_numbers<[1], [0], [0], [1], [0, 0, 1, 1], [], []>} : vector<288x8xbf16>, vector<8x128xbf16>, vector<288x128xf32> -> vector<288x128xf32>
    %35 = arith.addf %30, %34 : vector<288x128xf32>
    %36 = vector.extract_strided_slice %1 {offsets = [37, 0], sizes = [288, 8], strides = [1, 1]} : vector<342x8xbf16> to vector<288x8xbf16>
    %c2_35 = arith.constant 2 : index
    %c1_36 = arith.constant 1 : index
    %c0_37 = arith.constant 0 : index
    %c0_38 = arith.constant 0 : index
    %37 = vector.load %arg4[%c2_35, %c1_36, %c0_37, %c0_38] : memref<3x3x8x128xbf16, #tpu.memory_space<vmem>>, vector<1x1x8x128xbf16>
    %38 = vector.shape_cast %37 : vector<1x1x8x128xbf16> to vector<8x128xbf16>
    %cst_39 = arith.constant dense<0.000000e+00> : vector<288x128xf32>
    %39 = tpu.matmul %36, %38, %cst_39 {dimension_numbers = #tpu.dot_dimension_numbers<[1], [0], [0], [1], [0, 0, 1, 1], [], []>} : vector<288x8xbf16>, vector<8x128xbf16>, vector<288x128xf32> -> vector<288x128xf32>
    %40 = arith.addf %35, %39 : vector<288x128xf32>
    %41 = vector.extract_strided_slice %1 {offsets = [38, 0], sizes = [288, 8], strides = [1, 1]} : vector<342x8xbf16> to vector<288x8xbf16>
    %c2_40 = arith.constant 2 : index
    %c2_41 = arith.constant 2 : index
    %c0_42 = arith.constant 0 : index
    %c0_43 = arith.constant 0 : index
    %42 = vector.load %arg4[%c2_40, %c2_41, %c0_42, %c0_43] : memref<3x3x8x128xbf16, #tpu.memory_space<vmem>>, vector<1x1x8x128xbf16>
    %43 = vector.shape_cast %42 : vector<1x1x8x128xbf16> to vector<8x128xbf16>
    %cst_44 = arith.constant dense<0.000000e+00> : vector<288x128xf32>
    %44 = tpu.matmul %41, %43, %cst_44 {dimension_numbers = #tpu.dot_dimension_numbers<[1], [0], [0], [1], [0, 0, 1, 1], [], []>} : vector<288x8xbf16>, vector<8x128xbf16>, vector<288x128xf32> -> vector<288x128xf32>
    %45 = arith.addf %40, %44 : vector<288x128xf32>
    %c0_45 = arith.constant 0 : index
    %c0_46 = arith.constant 0 : index
    %46 = vector.load %arg5[%c0_45, %c0_46] : memref<1x128xf32, #tpu.memory_space<vmem>>, vector<1x128xf32>
    %47 = vector.broadcast %46 : vector<1x128xf32> to vector<288x128xf32>
    %48 = arith.mulf %45, %47 : vector<288x128xf32>
    %c0_47 = arith.constant 0 : index
    %c0_48 = arith.constant 0 : index
    %49 = vector.load %arg6[%c0_47, %c0_48] : memref<1x128xf32, #tpu.memory_space<vmem>>, vector<1x128xf32>
    %50 = vector.broadcast %49 : vector<1x128xf32> to vector<288x128xf32>
    %51 = arith.addf %48, %50 : vector<288x128xf32>
    %cst_49 = arith.constant 0.000000e+00 : f32
    %52 = vector.broadcast %cst_49 : f32 to vector<288x128xf32>
    %53 = arith.maximumf %51, %52 : vector<288x128xf32>
    %c0_50 = arith.constant 0 : index
    %c0_51 = arith.constant 0 : index
    %c0_52 = arith.constant 0 : index
    %c0_53 = arith.constant 0 : index
    %54 = vector.load %arg7[%c0_50, %c0_51, %c0_52, %c0_53] : memref<1x1x288x128xf32, #tpu.memory_space<vmem>>, vector<1x1x288x128xf32>
    %55 = vector.shape_cast %54 : vector<1x1x288x128xf32> to vector<288x128xf32>
    %56 = vector.shape_cast %53 : vector<288x128xf32> to vector<1x1x288x128xf32>
    tpu.vector_store %arg7[%c0_50, %c0_51, %c0_52, %c0_53], %56 {strides = array<i32>} : memref<1x1x288x128xf32, #tpu.memory_space<vmem>>, vector<1x1x288x128xf32>,
    return
  }
  func.func @transform_0(%arg0: i32, %arg1: i32, %arg2: i32) -> (i32, i32, i32, i32) {
    %c0_i32 = arith.constant 0 : i32
    %c0_i32_0 = arith.constant 0 : i32
    %c0_i32_1 = arith.constant 0 : i32
    return %arg0, %arg2, %c0_i32, %c0_i32_0 : i32, i32, i32, i32
  }
  func.func @transform_1(%arg0: i32, %arg1: i32, %arg2: i32) -> (i32, i32, i32, i32) {
    %c0_i32 = arith.constant 0 : i32
    %c0_i32_0 = arith.constant 0 : i32
    %c0_i32_1 = arith.constant 0 : i32
    %c0_i32_2 = arith.constant 0 : i32
    return %c0_i32, %c0_i32_0, %c0_i32_1, %arg1 : i32, i32, i32, i32
  }
  func.func @transform_2(%arg0: i32, %arg1: i32, %arg2: i32) -> (i32, i32) {
    %c0_i32 = arith.constant 0 : i32
    %c0_i32_0 = arith.constant 0 : i32
    return %c0_i32, %arg1 : i32, i32
  }
  func.func @transform_3(%arg0: i32, %arg1: i32, %arg2: i32) -> (i32, i32) {
    %c0_i32 = arith.constant 0 : i32
    %c0_i32_0 = arith.constant 0 : i32
    return %c0_i32, %arg1 : i32, i32
  }
  func.func @transform_4(%arg0: i32, %arg1: i32, %arg2: i32) -> (i32, i32, i32, i32) {
    %c0_i32 = arith.constant 0 : i32
    %c0_i32_0 = arith.constant 0 : i32
    return %arg0, %arg2, %c0_i32, %arg1 : i32, i32, i32, i32
  }
}

</mosaic_0001>

<llo_original>
// kernel: conv_norm_act.1
$region0: #{conv_norm_act.1}
  #allocation0 [shape = 'u32[]', space=smem, size = 0x4, offset = 0x4, fixed_abs, tag = 'smem constant byte address 0x4 - core index']
  #allocation1 [shape = 'u32[72,128]{1,0:T(1,128)}', space=vmem, size = 0x9000, scoped, tag = 'internal scratch']
  %s0 = inlined_call_operand.vmem [shape: bf16[2,1,342,8], index: 0, kind: input, shape index: {}]
  %s1 = inlined_call_operand.vmem [shape: bf16[3,3,8,128], index: 1, kind: input, shape index: {}]
  %s2 = inlined_call_operand.vmem [shape: f32[1,128], index: 2, kind: input, shape index: {}]
  %s3 = inlined_call_operand.vmem [shape: f32[1,128], index: 3, kind: input, shape index: {}]
  %s4 = inlined_call_operand.vmem [shape: f32[2,1,288,128], index: 4, kind: output, shape index: {}]
  %s5 = sld [smem:[#allocation0]]
  $region49: #{conv_norm_act.1} parent=0
    _
  %s7 = ssub.s32 1, %s5
  %s8 = scalar_select 0, %s7, %s5
  loop: start=0, step=1, limit=4
  $region2: #{conv_norm_act.1} parent=0 // loop_pre_header
    _
  $region3: #{conv_norm_act.1} parent=0 // loop_header
    %s10 = sphi 0, %s14
    %p11 = scmp.ge.s32.totalorder %s10, 4
    %s17 = sphi 0, %s36
    %s18 = sphi 0, %s32
    %s19 = sphi 0, %s28
    %s20 = sphi 0, %s17
    %s21 = sphi 0, %s18
    %s22 = sphi 0, %s19
    %s23 = sphi 0, %s20
    %s24 = sphi 0, %s21
    %s25 = sphi 0, %s22
    %s41 = sphi 0, %s43
    %s44 = sphi 0, %s41
    %s45 = sphi 0, %s44
    %s61 = sphi 0, %s45
    %s67 = sphi 0, %s69
    %s70 = sphi 0, %s67
    %s71 = sphi 0, %s70
    %s87 = sphi 0, %s71
    %s93 = sphi 0, %s95
    %s96 = sphi 0, %s93
    %s97 = sphi 0, %s96
    %s113 = sphi 0, %s97
    %s119 = sphi 0, %s121
    %s122 = sphi 0, %s119
    %s123 = sphi 0, %s122
    %s139 = sphi 0, %s123
    %s149 = sphi 0, %s151
    %s152 = sphi 0, %s149
    %s153 = sphi 0, %s152
    %s169 = sphi 0, %s153
  $region4: #{conv_norm_act.1} parent=0 // loop_header_branch
    %13 = sbr.rel (%p11) target = $region8
  $region5: #{conv_norm_act.1} parent=0 // loop_body
    %s15 = ssub.s32 %s10, 1
    %s16 = ssub.s32 %s10, 2
    %s26 = sadd.s32 1, %s19
    %p27 = scmp.ge.s32.totalorder %s26, 1
    %s28 = scalar_select %p27, 0, %s26
    %s29 = sadd.s32 1, %s18
    %s30 = scalar_select %p27, %s29, %s18
    %p31 = scmp.ge.s32.totalorder %s30, 1
    %s32 = scalar_select %p31, 0, %s30
    %s33 = sadd.s32 1, %s17
    %s34 = scalar_select %p31, %s33, %s17
    %p35 = scmp.ge.s32.totalorder %s34, 2
    %s36 = scalar_select %p35, 0, %s34
    %s37 = ssub.s32 %s17, %s36
    %s38 = ssub.s32 %s19, %s28
    %s39 = sor.u32 %s37, %s38
    %p40 = scmp.eq.s32.totalorder %s39, 0
    %s42 = sadd.s32 %s41, 1
    %s43 = scalar_select %p40, %s41, %s42
    %p46 = pneg %p40
    %p47 = scmp.eq.s32.totalorder %s10, 1
    %p48 = por %p46, %p47
    %p49 = scmp.ne.s32.totalorder %s41, %s44
    %p50 = scmp.eq.s32.totalorder %s10, 0
    %p51 = por %p49, %p50
    %p52 = scmp.ne.s32.totalorder %s41, %s44
    %p53 = scmp.eq.s32.totalorder %s15, 1
    %p54 = por %p52, %p53
    %p55 = scmp.ne.s32.totalorder %s44, %s45
    %p56 = scmp.eq.s32.totalorder %s15, 0
    %p57 = por %p55, %p56
    %p58 = scmp.ne.s32.totalorder %s44, %s45
    %p59 = scmp.eq.s32.totalorder %s16, 1
    %p60 = por %p58, %p59
    %p62 = scmp.ne.s32.totalorder %s45, %s61
    %p63 = scmp.eq.s32.totalorder %s16, 0
    %p64 = por %p62, %p63
    %s65 = ssub.s32 %s18, %s32
    %p66 = scmp.eq.s32.totalorder %s65, 0
    %s68 = sadd.s32 %s67, 1
    %s69 = scalar_select %p66, %s67, %s68
    %p72 = pneg %p66
    %p73 = scmp.eq.s32.totalorder %s10, 1
    %p74 = por %p72, %p73
    %p75 = scmp.ne.s32.totalorder %s67, %s70
    %p76 = scmp.eq.s32.totalorder %s10, 0
    %p77 = por %p75, %p76
    %p78 = scmp.ne.s32.totalorder %s67, %s70
    %p79 = scmp.eq.s32.totalorder %s15, 1
    %p80 = por %p78, %p79
    %p81 = scmp.ne.s32.totalorder %s70, %s71
    %p82 = scmp.eq.s32.totalorder %s15, 0
    %p83 = por %p81, %p82
    %p84 = scmp.ne.s32.totalorder %s70, %s71
    %p85 = scmp.eq.s32.totalorder %s16, 1
    %p86 = por %p84, %p85
    %p88 = scmp.ne.s32.totalorder %s71, %s87
    %p89 = scmp.eq.s32.totalorder %s16, 0
    %p90 = por %p88, %p89
    %s91 = ssub.s32 %s18, %s32
    %p92 = scmp.eq.s32.totalorder %s91, 0
    %s94 = sadd.s32 %s93, 1
    %s95 = scalar_select %p92, %s93, %s94
    %p98 = pneg %p92
    %p99 = scmp.eq.s32.totalorder %s10, 1
    %p100 = por %p98, %p99
    %p101 = scmp.ne.s32.totalorder %s93, %s96
    %p102 = scmp.eq.s32.totalorder %s10, 0
    %p103 = por %p101, %p102
    %p104 = scmp.ne.s32.totalorder %s93, %s96
    %p105 = scmp.eq.s32.totalorder %s15, 1
    %p106 = por %p104, %p105
    %p107 = scmp.ne.s32.totalorder %s96, %s97
    %p108 = scmp.eq.s32.totalorder %s15, 0
    %p109 = por %p107, %p108
    %p110 = scmp.ne.s32.totalorder %s96, %s97
    %p111 = scmp.eq.s32.totalorder %s16, 1
    %p112 = por %p110, %p111
    %p114 = scmp.ne.s32.totalorder %s97, %s113
    %p115 = scmp.eq.s32.totalorder %s16, 0
    %p116 = por %p114, %p115
    %s117 = ssub.s32 %s18, %s32
    %p118 = scmp.eq.s32.totalorder %s117, 0
    %s120 = sadd.s32 %s119, 1
    %s121 = scalar_select %p118, %s119, %s120
    %p124 = pneg %p118
    %p125 = scmp.eq.s32.totalorder %s10, 1
    %p126 = por %p124, %p125
    %p127 = scmp.ne.s32.totalorder %s119, %s122
    %p128 = scmp.eq.s32.totalorder %s10, 0
    %p129 = por %p127, %p128
    %p130 = scmp.ne.s32.totalorder %s119, %s122
    %p131 = scmp.eq.s32.totalorder %s15, 1
    %p132 = por %p130, %p131
    %p133 = scmp.ne.s32.totalorder %s122, %s123
    %p134 = scmp.eq.s32.totalorder %s15, 0
    %p135 = por %p133, %p134
    %p136 = scmp.ne.s32.totalorder %s122, %s123
    %p137 = scmp.eq.s32.totalorder %s16, 1
    %p138 = por %p136, %p137
    %p140 = scmp.ne.s32.totalorder %s123, %s139
    %p141 = scmp.eq.s32.totalorder %s16, 0
    %p142 = por %p140, %p141
    %s143 = ssub.s32 %s17, %s36
    %s144 = ssub.s32 %s19, %s28
    %s145 = sor.u32 %s143, %s144
    %s146 = ssub.s32 %s18, %s32
    %s147 = sor.u32 %s145, %s146
    %p148 = scmp.eq.s32.totalorder %s147, 0
    %s150 = sadd.s32 %s149, 1
    %s151 = scalar_select %p148, %s149, %s150
    %p154 = pneg %p148
    %p155 = scmp.eq.s32.totalorder %s10, 1
    %p156 = por %p154, %p155
    %p157 = scmp.ne.s32.totalorder %s149, %s152
    %p158 = scmp.eq.s32.totalorder %s10, 0
    %p159 = por %p157, %p158
    %p160 = scmp.ne.s32.totalorder %s149, %s152
    %p161 = scmp.eq.s32.totalorder %s15, 1
    %p162 = por %p160, %p161
    %p163 = scmp.ne.s32.totalorder %s152, %s153
    %p164 = scmp.eq.s32.totalorder %s15, 0
    %p165 = por %p163, %p164
    %p166 = scmp.ne.s32.totalorder %s152, %s153
    %p167 = scmp.eq.s32.totalorder %s16, 1
    %p168 = por %p166, %p167
    %p170 = scmp.ne.s32.totalorder %s153, %s169
    %p171 = scmp.eq.s32.totalorder %s16, 0
    %p172 = por %p170, %p171
    %p173 = scmp.le.s32.totalorder 1, %s10
    %p174 = scmp.lt.s32.totalorder %s10, 3
    %p175 = pnand %p173, %p174
    %p176 = pneg %p175
    // Predicated region
    $region9: #{conv_norm_act.1} parent=5 // pred_check
      _
    $region10: #{conv_norm_act.1} parent=5 // pred_check_branch
      %178 = sbr.rel (%p175) target = $region12
    $region11: #{conv_norm_act.1} parent=5 // pred_region
      %s179 = ssub.s32 %s10, 1
      // Predicated region
      $region13: #{conv_norm_act.1} parent=11 // pred_check
        %p180 = pneg %p83
      $region14: #{conv_norm_act.1} parent=11 // pred_check_branch
        %182 = sbr.rel (%p180) target = $region16
      $region15: #{conv_norm_act.1} parent=11 // pred_region
        %p183 = scmp.lt.s32.totalorder %s21, 0
        %s184 = scalar_select %p183, %s21, 0
        %s185 = smul.addr %s184, 4
        %s186 = scalar_lea.vmem %s1, %s185
      $region16: #{conv_norm_act.1} parent=11 // pred_fallthru
        _
      // Predicated region
      $region17: #{conv_norm_act.1} parent=11 // pred_check
        %p187 = pneg %p109
      $region18: #{conv_norm_act.1} parent=11 // pred_check_branch
        %189 = sbr.rel (%p187) target = $region20
      $region19: #{conv_norm_act.1} parent=11 // pred_region
        %p190 = scmp.lt.s32.totalorder %s21, 0
        %s191 = scalar_select %p190, %s21, 0
        %s192 = scalar_lea.vmem %s2, %s191
      $region20: #{conv_norm_act.1} parent=11 // pred_fallthru
        _
      // Predicated region
      $region21: #{conv_norm_act.1} parent=11 // pred_check
        %p193 = pneg %p135
      $region22: #{conv_norm_act.1} parent=11 // pred_check_branch
        %195 = sbr.rel (%p193) target = $region24
      $region23: #{conv_norm_act.1} parent=11 // pred_region
        %p196 = scmp.lt.s32.totalorder %s21, 0
        %s197 = scalar_select %p196, %s21, 0
        %s198 = scalar_lea.vmem %s3, %s197
      $region24: #{conv_norm_act.1} parent=11 // pred_fallthru
        _
    $region12: #{conv_norm_act.1} parent=5 // pred_fallthru
      _
    %p199 = scmp.lt.s32.totalorder %s10, 2
    // Predicated region
    $region25: #{conv_norm_act.1} parent=5 // pred_check
      %p200 = pneg %p199
    $region26: #{conv_norm_act.1} parent=5 // pred_check_branch
      %202 = sbr.rel (%p200) target = $region28
    $region27: #{conv_norm_act.1} parent=5 // pred_region
      // Predicated region
      $region29: #{conv_norm_act.1} parent=27 // pred_check
        %p203 = pneg %p51
      $region30: #{conv_norm_act.1} parent=27 // pred_check_branch
        %205 = sbr.rel (%p203) target = $region32
      $region31: #{conv_norm_act.1} parent=27 // pred_region
        %p206 = scmp.lt.s32.totalorder %s17, 1
        %s207 = scalar_select %p206, %s17, 1
        %p208 = scmp.lt.s32.totalorder %s19, 0
        %s209 = scalar_select %p208, %s19, 0
        %s210 = smul.addr %s209, 43
        %s211 = smul.addr %s207, 43
        %s212 = sadd.s32 %s210, %s211
        %s213 = smul.addr %s212, 4
        %s214 = scalar_lea.vmem %s0, %s213
      $region32: #{conv_norm_act.1} parent=27 // pred_fallthru
        _
    $region28: #{conv_norm_act.1} parent=5 // pred_fallthru
      _
    %p215 = scmp.le.s32.totalorder 1, %s10
    %p216 = scmp.lt.s32.totalorder %s10, 3
    %p217 = pnand %p215, %p216
    %p218 = pneg %p217
    // Predicated region
    $region33: #{conv_norm_act.1} parent=5 // pred_check
      _
    $region34: #{conv_norm_act.1} parent=5 // pred_check_branch
      %220 = sbr.rel (%p217) target = $region36
    $region35: #{conv_norm_act.1} parent=5 // pred_region
      %s221 = ssub.s32 %s10, 1
      %p222 = scmp.lt.s32.totalorder %s20, 1
      %s223 = scalar_select %p222, %s20, 1
      %p224 = scmp.lt.s32.totalorder %s22, 0
      %s225 = scalar_select %p224, %s22, 0
      %s226 = smul.addr %s225, 43
      %s227 = smul.addr %s223, 43
      %s228 = sadd.s32 %s226, %s227
      %s229 = smul.addr %s228, 4
      %s230 = scalar_lea.vmem %s0, %s229
      %p231 = pneg %p57
      %p232 = pneg %p54
      %p233 = scmp.lt.s32.totalorder %s21, 0
      %s234 = scalar_select %p233, %s21, 0
      %s235 = smul.addr %s234, 4
      %s236 = scalar_lea.vmem %s1, %s235
      %p237 = pneg %p83
      %p238 = pneg %p80
      %p239 = scmp.lt.s32.totalorder %s21, 0
      %s240 = scalar_select %p239, %s21, 0
      %s241 = scalar_lea.vmem %s2, %s240
      %p242 = pneg %p109
      %p243 = pneg %p106
      %p244 = scmp.lt.s32.totalorder %s21, 0
      %s245 = scalar_select %p244, %s21, 0
      %s246 = scalar_lea.vmem %s3, %s245
      %p247 = pneg %p135
      %p248 = pneg %p132
      %p249 = pneg %p165
      %p250 = pneg %p162
      %p251 = scmp.lt.s32.totalorder %s20, 1
      %s252 = scalar_select %p251, %s20, 1
      %p253 = scmp.lt.s32.totalorder %s22, 0
      %s254 = scalar_select %p253, %s22, 0
      %p255 = scmp.lt.s32.totalorder %s21, 0
      %s256 = scalar_select %p255, %s21, 0
      %s257 = smul.addr %s254, 36
      %s258 = sadd.s32 %s256, %s257
      %s259 = smul.addr %s252, 36
      %s260 = sadd.s32 %s258, %s259
      %s261 = smul.addr %s260, 8
      %s262 = scalar_lea.vmem %s4, %s261
      %p263 = scmp.lt.s32.totalorder %s20, 1
      %s264 = scalar_select %p263, %s20, 1
      %p265 = scmp.lt.s32.totalorder %s22, 0
      %s266 = scalar_select %p265, %s22, 0
      %s267 = smul.addr %s266, 43
      %s268 = smul.addr %s264, 43
      %s269 = sadd.s32 %s267, %s268
      %s270 = smul.addr %s269, 4
      %s271 = scalar_lea.vmem %s0, %s270
      %p272 = scmp.lt.s32.totalorder %s21, 0
      %s273 = scalar_select %p272, %s21, 0
      %s274 = smul.addr %s273, 4
      %s275 = scalar_lea.vmem %s1, %s274
      %p276 = scmp.lt.s32.totalorder %s21, 0
      %s277 = scalar_select %p276, %s21, 0
      %s278 = scalar_lea.vmem %s2, %s277
      %p279 = scmp.lt.s32.totalorder %s21, 0
      %s280 = scalar_select %p279, %s21, 0
      %s281 = scalar_lea.vmem %s3, %s280
      %p282 = scmp.lt.s32.totalorder %s20, 1
      %s283 = scalar_select %p282, %s20, 1
      %p284 = scmp.lt.s32.totalorder %s22, 0
      %s285 = scalar_select %p284, %s22, 0
      %p286 = scmp.lt.s32.totalorder %s21, 0
      %s287 = scalar_select %p286, %s21, 0
      %s288 = smul.addr %s285, 36
      %s289 = sadd.s32 %s287, %s288
      %s290 = smul.addr %s283, 36
      %s291 = sadd.s32 %s289, %s290
      %s292 = smul.addr %s291, 8
      %s293 = scalar_lea.vmem %s4, %s292
      %v295 = vld [vmem:[%s271] sm:$0xf]
      %v296 = vld [vmem:[%s271 + $0x4] sm:$0xf]
      %v297 = vld [vmem:[%s271 + $0x8] sm:$0xf]
      %v298 = vld [vmem:[%s271 + $0xc] sm:$0xf]
      %v299 = vld [vmem:[%s271 + $0x10] sm:$0xf]
      %v300 = vld [vmem:[%s271 + $0x14] sm:$0xf]
      %v301 = vld [vmem:[%s271 + $0x18] sm:$0xf]
      %v302 = vld [vmem:[%s271 + $0x1c] sm:$0xf]
      %v303 = vld [vmem:[%s271 + $0x20] sm:$0xf]
      %v304 = vld [vmem:[%s271 + $0x24] sm:$0xf]
      %v305 = vld [vmem:[%s271 + $0x28] sm:$0xf]
      %v306 = vld [vmem:[%s271 + $0x2c] sm:$0xf]
      %v307 = vld [vmem:[%s271 + $0x30] sm:$0xf]
      %v308 = vld [vmem:[%s271 + $0x34] sm:$0xf]
      %v309 = vld [vmem:[%s271 + $0x38] sm:$0xf]
      %v310 = vld [vmem:[%s271 + $0x3c] sm:$0xf]
      %v311 = vld [vmem:[%s271 + $0x40] sm:$0xf]
      %v312 = vld [vmem:[%s271 + $0x44] sm:$0xf]
      %v313 = vld [vmem:[%s271 + $0x48] sm:$0xf]
      %v314 = vld [vmem:[%s271 + $0x4c] sm:$0xf]
      %v315 = vld [vmem:[%s271 + $0x50] sm:$0xf]
      %v316 = vld [vmem:[%s271 + $0x54] sm:$0xf]
      %v317 = vld [vmem:[%s271 + $0x58] sm:$0xf]
      %v318 = vld [vmem:[%s271 + $0x5c] sm:$0xf]
      %v319 = vld [vmem:[%s271 + $0x60] sm:$0xf]
      %v320 = vld [vmem:[%s271 + $0x64] sm:$0xf]
      %v321 = vld [vmem:[%s271 + $0x68] sm:$0xf]
      %v322 = vld [vmem:[%s271 + $0x6c] sm:$0xf]
      %v323 = vld [vmem:[%s271 + $0x70] sm:$0xf]
      %v324 = vld [vmem:[%s271 + $0x74] sm:$0xf]
      %v325 = vld [vmem:[%s271 + $0x78] sm:$0xf]
      %v326 = vld [vmem:[%s271 + $0x7c] sm:$0xf]
      %v327 = vld [vmem:[%s271 + $0x80] sm:$0xf]
      %v328 = vld [vmem:[%s271 + $0x84] sm:$0xf]
      %v329 = vld [vmem:[%s271 + $0x88] sm:$0xf]
      %v330 = vld [vmem:[%s271 + $0x8c] sm:$0xf]
      %v331 = vld [vmem:[%s271 + $0x90] sm:$0xf]
      %v332 = vld [vmem:[%s271 + $0x94] sm:$0xf]
      %v333 = vld [vmem:[%s271 + $0x98] sm:$0xf]
      %v334 = vld [vmem:[%s271 + $0x9c] sm:$0xf]
      %v335 = vld [vmem:[%s271 + $0xa0] sm:$0xf]
      %v336 = vld [vmem:[%s275] sm:$0xf]
      %s337 = scalar_lea.vmem %s275, 4
      %v338 = vld [vmem:[%s337] sm:$0xf]
      %v376 = vunpack.c.l.b16 %v295
      %v377 = vunpack.c.l.b16 %v296
      %v378 = vunpack.c.l.b16 %v297
      %v379 = vunpack.c.l.b16 %v298
      %v380 = vunpack.c.l.b16 %v299
      %v381 = vunpack.c.l.b16 %v300
      %v382 = vunpack.c.l.b16 %v301
      %v383 = vunpack.c.l.b16 %v302
      %v384 = vunpack.c.l.b16 %v303
      %v385 = vunpack.c.l.b16 %v304
      %v386 = vunpack.c.l.b16 %v305
      %v387 = vunpack.c.l.b16 %v306
      %v388 = vunpack.c.l.b16 %v307
      %v389 = vunpack.c.l.b16 %v308
      %v390 = vunpack.c.l.b16 %v309
      %v391 = vunpack.c.l.b16 %v310
      %v392 = vunpack.c.l.b16 %v311
      %v393 = vunpack.c.l.b16 %v312
      %v394 = vunpack.c.l.b16 %v313
      %v395 = vunpack.c.l.b16 %v314
      %v396 = vunpack.c.l.b16 %v315
      %v397 = vunpack.c.l.b16 %v316
      %v398 = vunpack.c.l.b16 %v317
      %v399 = vunpack.c.l.b16 %v318
      %v400 = vunpack.c.l.b16 %v319
      %v401 = vunpack.c.l.b16 %v320
      %v402 = vunpack.c.l.b16 %v321
      %v403 = vunpack.c.l.b16 %v322
      %v404 = vunpack.c.l.b16 %v323
      %v405 = vunpack.c.l.b16 %v324
      %v406 = vunpack.c.l.b16 %v325
      %v407 = vunpack.c.l.b16 %v326
      %v408 = vunpack.c.l.b16 %v327
      %v409 = vunpack.c.l.b16 %v328
      %v410 = vunpack.c.l.b16 %v329
      %v411 = vunpack.c.l.b16 %v330
      %v412 = vunpack.c.l.b16 %v331
      %v413 = vpack.c.b16 %v377, %v376
      %v414 = vpack.c.b16 %v379, %v378
      %v415 = vpack.c.b16 %v381, %v380
      %v416 = vpack.c.b16 %v383, %v382
      %v417 = vpack.c.b16 %v385, %v384
      %v418 = vpack.c.b16 %v387, %v386
      %v419 = vpack.c.b16 %v389, %v388
      %v420 = vpack.c.b16 %v391, %v390
      %v421 = vpack.c.b16 %v393, %v392
      %v422 = vpack.c.b16 %v395, %v394
      %v423 = vpack.c.b16 %v397, %v396
      %v424 = vpack.c.b16 %v399, %v398
      %v425 = vpack.c.b16 %v401, %v400
      %v426 = vpack.c.b16 %v403, %v402
      %v427 = vpack.c.b16 %v405, %v404
      %v428 = vpack.c.b16 %v407, %v406
      %v429 = vpack.c.b16 %v409, %v408
      %v430 = vpack.c.b16 %v411, %v410
      %v431 = vpack.c.b16 %v412, %v412
      %vm432 = vsmask.f32 7424
      %v434 = vshrl.u32 %v413, 16
      %v436 = vshll.u32 %v413, 16
      %v438 = vrot.slane %v436, 1
      %v439 = vor.u32 %v434, %v438
      %v441 = vshll.u32 %v414, 16
      %v443 = vrot.slane %v441, 1
      %v444 = vsel %vm432, %v439, %v443
      %v445 = vshrl.u32 %v414, 16
      %v447 = vor.u32 %v445, %v443
      %v449 = vshll.u32 %v415, 16
      %v451 = vrot.slane %v449, 1
      %v452 = vsel %vm432, %v447, %v451
      %v453 = vshrl.u32 %v415, 16
      %v455 = vor.u32 %v453, %v451
      %v457 = vshll.u32 %v416, 16
      %v459 = vrot.slane %v457, 1
      %v460 = vsel %vm432, %v455, %v459
      %v461 = vshrl.u32 %v416, 16
      %v463 = vor.u32 %v461, %v459
      %v465 = vshll.u32 %v417, 16
      %v467 = vrot.slane %v465, 1
      %v468 = vsel %vm432, %v463, %v467
      %v469 = vshrl.u32 %v417, 16
      %v471 = vor.u32 %v469, %v467
      %v473 = vshll.u32 %v418, 16
      %v475 = vrot.slane %v473, 1
      %v476 = vsel %vm432, %v471, %v475
      %v477 = vshrl.u32 %v418, 16
      %v479 = vor.u32 %v477, %v475
      %v481 = vshll.u32 %v419, 16
      %v483 = vrot.slane %v481, 1
      %v484 = vsel %vm432, %v479, %v483
      %v485 = vshrl.u32 %v419, 16
      %v487 = vor.u32 %v485, %v483
      %v489 = vshll.u32 %v420, 16
      %v491 = vrot.slane %v489, 1
      %v492 = vsel %vm432, %v487, %v491
      %v493 = vshrl.u32 %v420, 16
      %v495 = vor.u32 %v493, %v491
      %v497 = vshll.u32 %v421, 16
      %v499 = vrot.slane %v497, 1
      %v500 = vsel %vm432, %v495, %v499
      %v501 = vshrl.u32 %v421, 16
      %v503 = vor.u32 %v501, %v499
      %v505 = vshll.u32 %v422, 16
      %v507 = vrot.slane %v505, 1
      %v508 = vsel %vm432, %v503, %v507
      %v509 = vshrl.u32 %v422, 16
      %v511 = vor.u32 %v509, %v507
      %v513 = vshll.u32 %v423, 16
      %v515 = vrot.slane %v513, 1
      %v516 = vsel %vm432, %v511, %v515
      %v517 = vshrl.u32 %v423, 16
      %v519 = vor.u32 %v517, %v515
      %v521 = vshll.u32 %v424, 16
      %v523 = vrot.slane %v521, 1
      %v524 = vsel %vm432, %v519, %v523
      %v525 = vshrl.u32 %v424, 16
      %v527 = vor.u32 %v525, %v523
      %v529 = vshll.u32 %v425, 16
      %v531 = vrot.slane %v529, 1
      %v532 = vsel %vm432, %v527, %v531
      %v533 = vshrl.u32 %v425, 16
      %v535 = vor.u32 %v533, %v531
      %v537 = vshll.u32 %v426, 16
      %v539 = vrot.slane %v537, 1
      %v540 = vsel %vm432, %v535, %v539
      %v541 = vshrl.u32 %v426, 16
      %v543 = vor.u32 %v541, %v539
      %v545 = vshll.u32 %v427, 16
      %v547 = vrot.slane %v545, 1
      %v548 = vsel %vm432, %v543, %v547
      %v549 = vshrl.u32 %v427, 16
      %v551 = vor.u32 %v549, %v547
      %v553 = vshll.u32 %v428, 16
      %v555 = vrot.slane %v553, 1
      %v556 = vsel %vm432, %v551, %v555
      %v557 = vshrl.u32 %v428, 16
      %v559 = vor.u32 %v557, %v555
      %v561 = vshll.u32 %v429, 16
      %v563 = vrot.slane %v561, 1
      %v564 = vsel %vm432, %v559, %v563
      %v565 = vshrl.u32 %v429, 16
      %v567 = vor.u32 %v565, %v563
      %v569 = vshll.u32 %v430, 16
      %v571 = vrot.slane %v569, 1
      %v572 = vsel %vm432, %v567, %v571
      %v573 = vshrl.u32 %v430, 16
      %v575 = vor.u32 %v573, %v571
      %v577 = vshll.u32 %v431, 16
      %v579 = vrot.slane %v577, 1
      %v580 = vsel %vm432, %v575, %v579
      %vm581 = vcmask 64512
      %v583 = vsel %vm581, %v444, 0
      %v586 = vsel %vm581, %v452, 0
      %v589 = vsel %vm581, %v460, 0
      %v592 = vsel %vm581, %v468, 0
      %v595 = vsel %vm581, %v476, 0
      %v598 = vsel %vm581, %v484, 0
      %v601 = vsel %vm581, %v492, 0
      %v604 = vsel %vm581, %v500, 0
      %v607 = vsel %vm581, %v508, 0
      %v610 = vsel %vm581, %v516, 0
      %v613 = vsel %vm581, %v524, 0
      %v616 = vsel %vm581, %v532, 0
      %v619 = vsel %vm581, %v540, 0
      %v622 = vsel %vm581, %v548, 0
      %v625 = vsel %vm581, %v556, 0
      %v628 = vsel %vm581, %v564, 0
      %v631 = vsel %vm581, %v572, 0
      %v634 = vsel %vm581, %v580, 0
      %vm636 = vcmask 1043456
      %v638 = vsel %vm636, %v338, 0
      %640 = vmatpush.bf16.msra.mxu0 0
      %641 = vmatpush.bf16.msra.mxu0 0
      %642 = vmatpush.bf16.msra.mxu0 0
      %643 = vmatpush.bf16.msra.mxu0 0
      %644 = vmatpush.bf16.msra.mxu0 0
      %645 = vmatpush.bf16.msra.mxu0 0
      %646 = vmatpush.bf16.msra.mxu0 0
      %647 = vmatpush.bf16.msra.mxu0 %v638
      %648 = vmatmul.bf16.gmra.mxu0 %v583
      %v649 = vpop.f32.mrf.mxu0
      %v650 = vadd.f32 0.0, %v649
      %v651 = vpop.f32.mrf.mxu0
      %v652 = vadd.f32 0.0, %v651
      %653 = vmatmul.bf16.gmra.mxu0 %v586
      %v654 = vpop.f32.mrf.mxu0
      %v655 = vadd.f32 0.0, %v654
      %v656 = vpop.f32.mrf.mxu0
      %v657 = vadd.f32 0.0, %v656
      %658 = vmatmul.bf16.gmra.mxu0 %v589
      %v659 = vpop.f32.mrf.mxu0
      %v660 = vadd.f32 0.0, %v659
      %v661 = vpop.f32.mrf.mxu0
      %v662 = vadd.f32 0.0, %v661
      %663 = vmatmul.bf16.gmra.mxu0 %v592
      %v664 = vpop.f32.mrf.mxu0
      %v665 = vadd.f32 0.0, %v664
      %v666 = vpop.f32.mrf.mxu0
      %v667 = vadd.f32 0.0, %v666
      %668 = vmatmul.bf16.gmra.mxu0 %v595
      %v669 = vpop.f32.mrf.mxu0
      %v670 = vadd.f32 0.0, %v669
      %v671 = vpop.f32.mrf.mxu0
      %v672 = vadd.f32 0.0, %v671
      %673 = vmatmul.bf16.gmra.mxu0 %v598
      %v674 = vpop.f32.mrf.mxu0
      %v675 = vadd.f32 0.0, %v674
      %v676 = vpop.f32.mrf.mxu0
      %v677 = vadd.f32 0.0, %v676
      %678 = vmatmul.bf16.gmra.mxu0 %v601
      %v679 = vpop.f32.mrf.mxu0
      %v680 = vadd.f32 0.0, %v679
      %v681 = vpop.f32.mrf.mxu0
      %v682 = vadd.f32 0.0, %v681
      %683 = vmatmul.bf16.gmra.mxu0 %v604
      %v684 = vpop.f32.mrf.mxu0
      %v685 = vadd.f32 0.0, %v684
      %v686 = vpop.f32.mrf.mxu0
      %v687 = vadd.f32 0.0, %v686
      %688 = vmatmul.bf16.gmra.mxu0 %v607
      %v689 = vpop.f32.mrf.mxu0
      %v690 = vadd.f32 0.0, %v689
      %v691 = vpop.f32.mrf.mxu0
      %v692 = vadd.f32 0.0, %v691
      %693 = vmatmul.bf16.gmra.mxu0 %v610
      %v694 = vpop.f32.mrf.mxu0
      %v695 = vadd.f32 0.0, %v694
      %v696 = vpop.f32.mrf.mxu0
      %v697 = vadd.f32 0.0, %v696
      %698 = vmatmul.bf16.gmra.mxu0 %v613
      %v699 = vpop.f32.mrf.mxu0
      %v700 = vadd.f32 0.0, %v699
      %v701 = vpop.f32.mrf.mxu0
      %v702 = vadd.f32 0.0, %v701
      %703 = vmatmul.bf16.gmra.mxu0 %v616
      %v704 = vpop.f32.mrf.mxu0
      %v705 = vadd.f32 0.0, %v704
      %v706 = vpop.f32.mrf.mxu0
      %v707 = vadd.f32 0.0, %v706
      %708 = vmatmul.bf16.gmra.mxu0 %v619
      %v709 = vpop.f32.mrf.mxu0
      %v710 = vadd.f32 0.0, %v709
      %v711 = vpop.f32.mrf.mxu0
      %v712 = vadd.f32 0.0, %v711
      %713 = vmatmul.bf16.gmra.mxu0 %v622
      %v714 = vpop.f32.mrf.mxu0
      %v715 = vadd.f32 0.0, %v714
      %v716 = vpop.f32.mrf.mxu0
      %v717 = vadd.f32 0.0, %v716
      %718 = vmatmul.bf16.gmra.mxu0 %v625
      %v719 = vpop.f32.mrf.mxu0
      %v720 = vadd.f32 0.0, %v719
      %v721 = vpop.f32.mrf.mxu0
      %v722 = vadd.f32 0.0, %v721
      %723 = vmatmul.bf16.gmra.mxu0 %v628
      %v724 = vpop.f32.mrf.mxu0
      %v725 = vadd.f32 0.0, %v724
      %v726 = vpop.f32.mrf.mxu0
      %v727 = vadd.f32 0.0, %v726
      %728 = vmatmul.bf16.gmra.mxu0 %v631
      %v729 = vpop.f32.mrf.mxu0
      %v730 = vadd.f32 0.0, %v729
      %v731 = vpop.f32.mrf.mxu0
      %v732 = vadd.f32 0.0, %v731
      %733 = vmatmul.bf16.gmra.mxu0 %v634
      %v734 = vpop.f32.mrf.mxu0
      %v735 = vadd.f32 0.0, %v734
      %v736 = vpop.f32.mrf.mxu0
      %v737 = vadd.f32 0.0, %v736
      %738 = vdwg.mxu0
      %v739 = vsel %vm581, %v413, 0
      %v741 = vsel %vm581, %v414, 0
      %v743 = vsel %vm581, %v415, 0
      %v745 = vsel %vm581, %v416, 0
      %v747 = vsel %vm581, %v417, 0
      %v749 = vsel %vm581, %v418, 0
      %v751 = vsel %vm581, %v419, 0
      %v753 = vsel %vm581, %v420, 0
      %v755 = vsel %vm581, %v421, 0
      %v757 = vsel %vm581, %v422, 0
      %v759 = vsel %vm581, %v423, 0
      %v761 = vsel %vm581, %v424, 0
      %v763 = vsel %vm581, %v425, 0
      %v765 = vsel %vm581, %v426, 0
      %v767 = vsel %vm581, %v427, 0
      %v769 = vsel %vm581, %v428, 0
      %v771 = vsel %vm581, %v429, 0
      %v773 = vsel %vm581, %v430, 0
      %v776 = vsel %vm636, %v336, 0
      %778 = vmatpush.bf16.msra.mxu0 0
      %779 = vmatpush.bf16.msra.mxu0 0
      %780 = vmatpush.bf16.msra.mxu0 0
      %781 = vmatpush.bf16.msra.mxu0 0
      %782 = vmatpush.bf16.msra.mxu0 0
      %783 = vmatpush.bf16.msra.mxu0 0
      %784 = vmatpush.bf16.msra.mxu0 0
      %785 = vmatpush.bf16.msra.mxu0 %v776
      %786 = vmatmul.bf16.gmra.mxu0 %v739
      %v787 = vpop.f32.mrf.mxu0
      %v788 = vadd.f32 %v650, %v787
      %v789 = vpop.f32.mrf.mxu0
      %v790 = vadd.f32 %v652, %v789
      %791 = vmatmul.bf16.gmra.mxu0 %v741
      %v792 = vpop.f32.mrf.mxu0
      %v793 = vadd.f32 %v655, %v792
      %v794 = vpop.f32.mrf.mxu0
      %v795 = vadd.f32 %v657, %v794
      %796 = vmatmul.bf16.gmra.mxu0 %v743
      %v797 = vpop.f32.mrf.mxu0
      %v798 = vadd.f32 %v660, %v797
      %v799 = vpop.f32.mrf.mxu0
      %v800 = vadd.f32 %v662, %v799
      %801 = vmatmul.bf16.gmra.mxu0 %v745
      %v802 = vpop.f32.mrf.mxu0
      %v803 = vadd.f32 %v665, %v802
      %v804 = vpop.f32.mrf.mxu0
      %v805 = vadd.f32 %v667, %v804
      %806 = vmatmul.bf16.gmra.mxu0 %v747
      %v807 = vpop.f32.mrf.mxu0
      %v808 = vadd.f32 %v670, %v807
      %v809 = vpop.f32.mrf.mxu0
      %v810 = vadd.f32 %v672, %v809
      %811 = vmatmul.bf16.gmra.mxu0 %v749
      %v812 = vpop.f32.mrf.mxu0
      %v813 = vadd.f32 %v675, %v812
      %v814 = vpop.f32.mrf.mxu0
      %v815 = vadd.f32 %v677, %v814
      %816 = vmatmul.bf16.gmra.mxu0 %v751
      %v817 = vpop.f32.mrf.mxu0
      %v818 = vadd.f32 %v680, %v817
      %v819 = vpop.f32.mrf.mxu0
      %v820 = vadd.f32 %v682, %v819
      %821 = vmatmul.bf16.gmra.mxu0 %v753
      %v822 = vpop.f32.mrf.mxu0
      %v823 = vadd.f32 %v685, %v822
      %v824 = vpop.f32.mrf.mxu0
      %v825 = vadd.f32 %v687, %v824
      %826 = vmatmul.bf16.gmra.mxu0 %v755
      %v827 = vpop.f32.mrf.mxu0
      %v828 = vadd.f32 %v690, %v827
      %v829 = vpop.f32.mrf.mxu0
      %v830 = vadd.f32 %v692, %v829
      %831 = vmatmul.bf16.gmra.mxu0 %v757
      %v832 = vpop.f32.mrf.mxu0
      %v833 = vadd.f32 %v695, %v832
      %v834 = vpop.f32.mrf.mxu0
      %v835 = vadd.f32 %v697, %v834
      %836 = vmatmul.bf16.gmra.mxu0 %v759
      %v837 = vpop.f32.mrf.mxu0
      %v838 = vadd.f32 %v700, %v837
      %v839 = vpop.f32.mrf.mxu0
      %v840 = vadd.f32 %v702, %v839
      %841 = vmatmul.bf16.gmra.mxu0 %v761
      %v842 = vpop.f32.mrf.mxu0
      %v843 = vadd.f32 %v705, %v842
      %v844 = vpop.f32.mrf.mxu0
      %v845 = vadd.f32 %v707, %v844
      %846 = vmatmul.bf16.gmra.mxu0 %v763
      %v847 = vpop.f32.mrf.mxu0
      %v848 = vadd.f32 %v710, %v847
      %v849 = vpop.f32.mrf.mxu0
      %v850 = vadd.f32 %v712, %v849
      %851 = vmatmul.bf16.gmra.mxu0 %v765
      %v852 = vpop.f32.mrf.mxu0
      %v853 = vadd.f32 %v715, %v852
      %v854 = vpop.f32.mrf.mxu0
      %v855 = vadd.f32 %v717, %v854
      %856 = vmatmul.bf16.gmra.mxu0 %v767
      %v857 = vpop.f32.mrf.mxu0
      %v858 = vadd.f32 %v720, %v857
      %v859 = vpop.f32.mrf.mxu0
      %v860 = vadd.f32 %v722, %v859
      %861 = vmatmul.bf16.gmra.mxu0 %v769
      %v862 = vpop.f32.mrf.mxu0
      %v863 = vadd.f32 %v725, %v862
      %v864 = vpop.f32.mrf.mxu0
      %v865 = vadd.f32 %v727, %v864
      %866 = vmatmul.bf16.gmra.mxu0 %v771
      %v867 = vpop.f32.mrf.mxu0
      %v868 = vadd.f32 %v730, %v867
      %v869 = vpop.f32.mrf.mxu0
      %v870 = vadd.f32 %v732, %v869
      %871 = vmatmul.bf16.gmra.mxu0 %v773
      %v872 = vpop.f32.mrf.mxu0
      %v873 = vadd.f32 %v735, %v872
      %v874 = vpop.f32.mrf.mxu0
      %v875 = vadd.f32 %v737, %v874
      %876 = vdwg.mxu0
      %s877 = scalar_lea.vmem %s275, 8
      %v878 = vld [vmem:[%s877] sm:$0xf]
      %vm879 = vcmask 1046528
      %v880 = vrot.slane %v413, 1
      %v881 = vrot.slane %v414, 1
      %v882 = vsel %vm879, %v880, %v881
      %v883 = vrot.slane %v415, 1
      %v884 = vsel %vm879, %v881, %v883
      %v885 = vrot.slane %v416, 1
      %v886 = vsel %vm879, %v883, %v885
      %v887 = vrot.slane %v417, 1
      %v888 = vsel %vm879, %v885, %v887
      %v889 = vrot.slane %v418, 1
      %v890 = vsel %vm879, %v887, %v889
      %v891 = vrot.slane %v419, 1
      %v892 = vsel %vm879, %v889, %v891
      %v893 = vrot.slane %v420, 1
      %v894 = vsel %vm879, %v891, %v893
      %v895 = vrot.slane %v421, 1
      %v896 = vsel %vm879, %v893, %v895
      %v897 = vrot.slane %v422, 1
      %v898 = vsel %vm879, %v895, %v897
      %v899 = vrot.slane %v423, 1
      %v900 = vsel %vm879, %v897, %v899
      %v901 = vrot.slane %v424, 1
      %v902 = vsel %vm879, %v899, %v901
      %v903 = vrot.slane %v425, 1
      %v904 = vsel %vm879, %v901, %v903
      %v905 = vrot.slane %v426, 1
      %v906 = vsel %vm879, %v903, %v905
      %v907 = vrot.slane %v427, 1
      %v908 = vsel %vm879, %v905, %v907
      %v909 = vrot.slane %v428, 1
      %v910 = vsel %vm879, %v907, %v909
      %v911 = vrot.slane %v429, 1
      %v912 = vsel %vm879, %v909, %v911
      %v913 = vrot.slane %v430, 1
      %v914 = vsel %vm879, %v911, %v913
      %v915 = vrot.slane %v431, 1
      %v916 = vsel %vm879, %v913, %v915
      %v918 = vsel %vm581, %v882, 0
      %v921 = vsel %vm581, %v884, 0
      %v924 = vsel %vm581, %v886, 0
      %v927 = vsel %vm581, %v888, 0
      %v930 = vsel %vm581, %v890, 0
      %v933 = vsel %vm581, %v892, 0
      %v936 = vsel %vm581, %v894, 0
      %v939 = vsel %vm581, %v896, 0
      %v942 = vsel %vm581, %v898, 0
      %v945 = vsel %vm581, %v900, 0
      %v948 = vsel %vm581, %v902, 0
      %v951 = vsel %vm581, %v904, 0
      %v954 = vsel %vm581, %v906, 0
      %v957 = vsel %vm581, %v908, 0
      %v960 = vsel %vm581, %v910, 0
      %v963 = vsel %vm581, %v912, 0
      %v966 = vsel %vm581, %v914, 0
      %v969 = vsel %vm581, %v916, 0
      %v972 = vsel %vm636, %v878, 0
      %974 = vmatpush.bf16.msra.mxu0 0
      %975 = vmatpush.bf16.msra.mxu0 0
      %976 = vmatpush.bf16.msra.mxu0 0
      %977 = vmatpush.bf16.msra.mxu0 0
      %978 = vmatpush.bf16.msra.mxu0 0
      %979 = vmatpush.bf16.msra.mxu0 0
      %980 = vmatpush.bf16.msra.mxu0 0
      %981 = vmatpush.bf16.msra.mxu0 %v972
      %982 = vmatmul.bf16.gmra.mxu0 %v918
      %v983 = vpop.f32.mrf.mxu0
      %v984 = vadd.f32 0.0, %v983
      %v985 = vpop.f32.mrf.mxu0
      %v986 = vadd.f32 0.0, %v985
      %987 = vmatmul.bf16.gmra.mxu0 %v921
      %v988 = vpop.f32.mrf.mxu0
      %v989 = vadd.f32 0.0, %v988
      %v990 = vpop.f32.mrf.mxu0
      %v991 = vadd.f32 0.0, %v990
      %992 = vmatmul.bf16.gmra.mxu0 %v924
      %v993 = vpop.f32.mrf.mxu0
      %v994 = vadd.f32 0.0, %v993
      %v995 = vpop.f32.mrf.mxu0
      %v996 = vadd.f32 0.0, %v995
      %997 = vmatmul.bf16.gmra.mxu0 %v927
      %v998 = vpop.f32.mrf.mxu0
      %v999 = vadd.f32 0.0, %v998
      %v1000 = vpop.f32.mrf.mxu0
      %v1001 = vadd.f32 0.0, %v1000
      %1002 = vmatmul.bf16.gmra.mxu0 %v930
      %v1003 = vpop.f32.mrf.mxu0
      %v1004 = vadd.f32 0.0, %v1003
      %v1005 = vpop.f32.mrf.mxu0
      %v1006 = vadd.f32 0.0, %v1005
      %1007 = vmatmul.bf16.gmra.mxu0 %v933
      %v1008 = vpop.f32.mrf.mxu0
      %v1009 = vadd.f32 0.0, %v1008
      %v1010 = vpop.f32.mrf.mxu0
      %v1011 = vadd.f32 0.0, %v1010
      %1012 = vmatmul.bf16.gmra.mxu0 %v936
      %v1013 = vpop.f32.mrf.mxu0
      %v1014 = vadd.f32 0.0, %v1013
      %v1015 = vpop.f32.mrf.mxu0
      %v1016 = vadd.f32 0.0, %v1015
      %1017 = vmatmul.bf16.gmra.mxu0 %v939
      %v1018 = vpop.f32.mrf.mxu0
      %v1019 = vadd.f32 0.0, %v1018
      %v1020 = vpop.f32.mrf.mxu0
      %v1021 = vadd.f32 0.0, %v1020
      %1022 = vmatmul.bf16.gmra.mxu0 %v942
      %v1023 = vpop.f32.mrf.mxu0
      %v1024 = vadd.f32 0.0, %v1023
      %v1025 = vpop.f32.mrf.mxu0
      %v1026 = vadd.f32 0.0, %v1025
      %1027 = vmatmul.bf16.gmra.mxu0 %v945
      %v1028 = vpop.f32.mrf.mxu0
      %v1029 = vadd.f32 0.0, %v1028
      %v1030 = vpop.f32.mrf.mxu0
      %v1031 = vadd.f32 0.0, %v1030
      %1032 = vmatmul.bf16.gmra.mxu0 %v948
      %v1033 = vpop.f32.mrf.mxu0
      %v1034 = vadd.f32 0.0, %v1033
      %v1035 = vpop.f32.mrf.mxu0
      %v1036 = vadd.f32 0.0, %v1035
      %1037 = vmatmul.bf16.gmra.mxu0 %v951
      %v1038 = vpop.f32.mrf.mxu0
      %v1039 = vadd.f32 0.0, %v1038
      %v1040 = vpop.f32.mrf.mxu0
      %v1041 = vadd.f32 0.0, %v1040
      %1042 = vmatmul.bf16.gmra.mxu0 %v954
      %v1043 = vpop.f32.mrf.mxu0
      %v1044 = vadd.f32 0.0, %v1043
      %v1045 = vpop.f32.mrf.mxu0
      %v1046 = vadd.f32 0.0, %v1045
      %1047 = vmatmul.bf16.gmra.mxu0 %v957
      %v1048 = vpop.f32.mrf.mxu0
      %v1049 = vadd.f32 0.0, %v1048
      %v1050 = vpop.f32.mrf.mxu0
      %v1051 = vadd.f32 0.0, %v1050
      %1052 = vmatmul.bf16.gmra.mxu0 %v960
      %v1053 = vpop.f32.mrf.mxu0
      %v1054 = vadd.f32 0.0, %v1053
      %v1055 = vpop.f32.mrf.mxu0
      %v1056 = vadd.f32 0.0, %v1055
      %1057 = vmatmul.bf16.gmra.mxu0 %v963
      %v1058 = vpop.f32.mrf.mxu0
      %v1059 = vadd.f32 0.0, %v1058
      %v1060 = vpop.f32.mrf.mxu0
      %v1061 = vadd.f32 0.0, %v1060
      %1062 = vmatmul.bf16.gmra.mxu0 %v966
      %v1063 = vpop.f32.mrf.mxu0
      %v1064 = vadd.f32 0.0, %v1063
      %v1065 = vpop.f32.mrf.mxu0
      %v1066 = vadd.f32 0.0, %v1065
      %1067 = vmatmul.bf16.gmra.mxu0 %v969
      %v1068 = vpop.f32.mrf.mxu0
      %v1069 = vadd.f32 0.0, %v1068
      %v1070 = vpop.f32.mrf.mxu0
      %v1071 = vadd.f32 0.0, %v1070
      %1072 = vdwg.mxu0
      %v1073 = vadd.f32 %v788, %v984
      %v1074 = vadd.f32 %v790, %v986
      %v1075 = vadd.f32 %v793, %v989
      %v1076 = vadd.f32 %v795, %v991
      %v1077 = vadd.f32 %v798, %v994
      %v1078 = vadd.f32 %v800, %v996
      %v1079 = vadd.f32 %v803, %v999
      %v1080 = vadd.f32 %v805, %v1001
      %v1081 = vadd.f32 %v808, %v1004
      %v1082 = vadd.f32 %v810, %v1006
      %v1083 = vadd.f32 %v813, %v1009
      %v1084 = vadd.f32 %v815, %v1011
      %v1085 = vadd.f32 %v818, %v1014
      %v1086 = vadd.f32 %v820, %v1016
      %v1087 = vadd.f32 %v823, %v1019
      %v1088 = vadd.f32 %v825, %v1021
      %v1089 = vadd.f32 %v828, %v1024
      %v1090 = vadd.f32 %v830, %v1026
      %v1091 = vadd.f32 %v833, %v1029
      %v1092 = vadd.f32 %v835, %v1031
      %v1093 = vadd.f32 %v838, %v1034
      %v1094 = vadd.f32 %v840, %v1036
      %v1095 = vadd.f32 %v843, %v1039
      %v1096 = vadd.f32 %v845, %v1041
      %v1097 = vadd.f32 %v848, %v1044
      %v1098 = vadd.f32 %v850, %v1046
      %v1099 = vadd.f32 %v853, %v1049
      %v1100 = vadd.f32 %v855, %v1051
      %v1101 = vadd.f32 %v858, %v1054
      %v1102 = vadd.f32 %v860, %v1056
      %v1103 = vadd.f32 %v863, %v1059
      %v1104 = vadd.f32 %v865, %v1061
      %v1105 = vadd.f32 %v868, %v1064
      %v1106 = vadd.f32 %v870, %v1066
      %v1107 = vadd.f32 %v873, %v1069
      %v1108 = vadd.f32 %v875, %v1071
      %s1109 = scalar_lea.vmem %s275, 12
      %v1110 = vld [vmem:[%s1109] sm:$0xf]
      %v1113 = vunpack.c.l.b16 %v332
      %v1114 = vunpack.c.l.b16 %v333
      %v1115 = vpack.c.b16 %v1113, %v412
      %v1116 = vpack.c.b16 %v1114, %v1114
      %v1117 = vrot.slane %v1115, 1
      %v1118 = vsel %vm879, %v913, %v1117
      %v1119 = vrot.slane %v1116, 1
      %v1120 = vsel %vm879, %v1117, %v1119
      %v1122 = vsel %vm581, %v1118, 0
      %v1125 = vsel %vm581, %v1120, 0
      %v1128 = vsel %vm636, %v1110, 0
      %1130 = vmatpush.bf16.msra.mxu0 0
      %1131 = vmatpush.bf16.msra.mxu0 0
      %1132 = vmatpush.bf16.msra.mxu0 0
      %1133 = vmatpush.bf16.msra.mxu0 0
      %1134 = vmatpush.bf16.msra.mxu0 0
      %1135 = vmatpush.bf16.msra.mxu0 0
      %1136 = vmatpush.bf16.msra.mxu0 0
      %1137 = vmatpush.bf16.msra.mxu0 %v1128
      %1138 = vmatmul.bf16.gmra.mxu0 %v921
      %v1139 = vpop.f32.mrf.mxu0
      %v1140 = vadd.f32 0.0, %v1139
      %v1141 = vpop.f32.mrf.mxu0
      %v1142 = vadd.f32 0.0, %v1141
      %1143 = vmatmul.bf16.gmra.mxu0 %v924
      %v1144 = vpop.f32.mrf.mxu0
      %v1145 = vadd.f32 0.0, %v1144
      %v1146 = vpop.f32.mrf.mxu0
      %v1147 = vadd.f32 0.0, %v1146
      %1148 = vmatmul.bf16.gmra.mxu0 %v927
      %v1149 = vpop.f32.mrf.mxu0
      %v1150 = vadd.f32 0.0, %v1149
      %v1151 = vpop.f32.mrf.mxu0
      %v1152 = vadd.f32 0.0, %v1151
      %1153 = vmatmul.bf16.gmra.mxu0 %v930
      %v1154 = vpop.f32.mrf.mxu0
      %v1155 = vadd.f32 0.0, %v1154
      %v1156 = vpop.f32.mrf.mxu0
      %v1157 = vadd.f32 0.0, %v1156
      %1158 = vmatmul.bf16.gmra.mxu0 %v933
      %v1159 = vpop.f32.mrf.mxu0
      %v1160 = vadd.f32 0.0, %v1159
      %v1161 = vpop.f32.mrf.mxu0
      %v1162 = vadd.f32 0.0, %v1161
      %1163 = vmatmul.bf16.gmra.mxu0 %v936
      %v1164 = vpop.f32.mrf.mxu0
      %v1165 = vadd.f32 0.0, %v1164
      %v1166 = vpop.f32.mrf.mxu0
      %v1167 = vadd.f32 0.0, %v1166
      %1168 = vmatmul.bf16.gmra.mxu0 %v939
      %v1169 = vpop.f32.mrf.mxu0
      %v1170 = vadd.f32 0.0, %v1169
      %v1171 = vpop.f32.mrf.mxu0
      %v1172 = vadd.f32 0.0, %v1171
      %1173 = vmatmul.bf16.gmra.mxu0 %v942
      %v1174 = vpop.f32.mrf.mxu0
      %v1175 = vadd.f32 0.0, %v1174
      %v1176 = vpop.f32.mrf.mxu0
      %v1177 = vadd.f32 0.0, %v1176
      %1178 = vmatmul.bf16.gmra.mxu0 %v945
      %v1179 = vpop.f32.mrf.mxu0
      %v1180 = vadd.f32 0.0, %v1179
      %v1181 = vpop.f32.mrf.mxu0
      %v1182 = vadd.f32 0.0, %v1181
      %1183 = vmatmul.bf16.gmra.mxu0 %v948
      %v1184 = vpop.f32.mrf.mxu0
      %v1185 = vadd.f32 0.0, %v1184
      %v1186 = vpop.f32.mrf.mxu0
      %v1187 = vadd.f32 0.0, %v1186
      %1188 = vmatmul.bf16.gmra.mxu0 %v951
      %v1189 = vpop.f32.mrf.mxu0
      %v1190 = vadd.f32 0.0, %v1189
      %v1191 = vpop.f32.mrf.mxu0
      %v1192 = vadd.f32 0.0, %v1191
      %1193 = vmatmul.bf16.gmra.mxu0 %v954
      %v1194 = vpop.f32.mrf.mxu0
      %v1195 = vadd.f32 0.0, %v1194
      %v1196 = vpop.f32.mrf.mxu0
      %v1197 = vadd.f32 0.0, %v1196
      %1198 = vmatmul.bf16.gmra.mxu0 %v957
      %v1199 = vpop.f32.mrf.mxu0
      %v1200 = vadd.f32 0.0, %v1199
      %v1201 = vpop.f32.mrf.mxu0
      %v1202 = vadd.f32 0.0, %v1201
      %1203 = vmatmul.bf16.gmra.mxu0 %v960
      %v1204 = vpop.f32.mrf.mxu0
      %v1205 = vadd.f32 0.0, %v1204
      %v1206 = vpop.f32.mrf.mxu0
      %v1207 = vadd.f32 0.0, %v1206
      %1208 = vmatmul.bf16.gmra.mxu0 %v963
      %v1209 = vpop.f32.mrf.mxu0
      %v1210 = vadd.f32 0.0, %v1209
      %v1211 = vpop.f32.mrf.mxu0
      %v1212 = vadd.f32 0.0, %v1211
      %1213 = vmatmul.bf16.gmra.mxu0 %v966
      %v1214 = vpop.f32.mrf.mxu0
      %v1215 = vadd.f32 0.0, %v1214
      %v1216 = vpop.f32.mrf.mxu0
      %v1217 = vadd.f32 0.0, %v1216
      %1218 = vmatmul.bf16.gmra.mxu0 %v1122
      %v1219 = vpop.f32.mrf.mxu0
      %v1220 = vadd.f32 0.0, %v1219
      %v1221 = vpop.f32.mrf.mxu0
      %v1222 = vadd.f32 0.0, %v1221
      %1223 = vmatmul.bf16.gmra.mxu0 %v1125
      %v1224 = vpop.f32.mrf.mxu0
      %v1225 = vadd.f32 0.0, %v1224
      %v1226 = vpop.f32.mrf.mxu0
      %v1227 = vadd.f32 0.0, %v1226
      %1228 = vdwg.mxu0
      %v1229 = vadd.f32 %v1073, %v1140
      %v1230 = vadd.f32 %v1074, %v1142
      %v1231 = vadd.f32 %v1075, %v1145
      %v1232 = vadd.f32 %v1076, %v1147
      %v1233 = vadd.f32 %v1077, %v1150
      %v1234 = vadd.f32 %v1078, %v1152
      %v1235 = vadd.f32 %v1079, %v1155
      %v1236 = vadd.f32 %v1080, %v1157
      %v1237 = vadd.f32 %v1081, %v1160
      %v1238 = vadd.f32 %v1082, %v1162
      %v1239 = vadd.f32 %v1083, %v1165
      %v1240 = vadd.f32 %v1084, %v1167
      %v1241 = vadd.f32 %v1085, %v1170
      %v1242 = vadd.f32 %v1086, %v1172
      %v1243 = vadd.f32 %v1087, %v1175
      %v1244 = vadd.f32 %v1088, %v1177
      %v1245 = vadd.f32 %v1089, %v1180
      %v1246 = vadd.f32 %v1090, %v1182
      %v1247 = vadd.f32 %v1091, %v1185
      %v1248 = vadd.f32 %v1092, %v1187
      %v1249 = vadd.f32 %v1093, %v1190
      %v1250 = vadd.f32 %v1094, %v1192
      %v1251 = vadd.f32 %v1095, %v1195
      %v1252 = vadd.f32 %v1096, %v1197
      %v1253 = vadd.f32 %v1097, %v1200
      %v1254 = vadd.f32 %v1098, %v1202
      %v1255 = vadd.f32 %v1099, %v1205
      %v1256 = vadd.f32 %v1100, %v1207
      %v1257 = vadd.f32 %v1101, %v1210
      %v1258 = vadd.f32 %v1102, %v1212
      %v1259 = vadd.f32 %v1103, %v1215
      %v1260 = vadd.f32 %v1104, %v1217
      %v1261 = vadd.f32 %v1105, %v1220
      %v1262 = vadd.f32 %v1106, %v1222
      %v1263 = vadd.f32 %v1107, %v1225
      %v1264 = vadd.f32 %v1108, %v1227
      %s1265 = scalar_lea.vmem %s275, 16
      %v1266 = vld [vmem:[%s1265] sm:$0xf]
      %vm1267 = vsmask.f32 6400
      %v1268 = vrot.slane %v445, 1
      %v1269 = vrot.slane %v441, 2
      %v1270 = vor.u32 %v1268, %v1269
      %v1271 = vrot.slane %v453, 1
      %v1272 = vrot.slane %v449, 2
      %v1273 = vor.u32 %v1271, %v1272
      %v1274 = vsel %vm1267, %v1270, %v1273
      %v1275 = vrot.slane %v461, 1
      %v1276 = vrot.slane %v457, 2
      %v1277 = vor.u32 %v1275, %v1276
      %v1278 = vsel %vm1267, %v1273, %v1277
      %v1279 = vrot.slane %v469, 1
      %v1280 = vrot.slane %v465, 2
      %v1281 = vor.u32 %v1279, %v1280
      %v1282 = vsel %vm1267, %v1277, %v1281
      %v1283 = vrot.slane %v477, 1
      %v1284 = vrot.slane %v473, 2
      %v1285 = vor.u32 %v1283, %v1284
      %v1286 = vsel %vm1267, %v1281, %v1285
      %v1287 = vrot.slane %v485, 1
      %v1288 = vrot.slane %v481, 2
      %v1289 = vor.u32 %v1287, %v1288
      %v1290 = vsel %vm1267, %v1285, %v1289
      %v1291 = vrot.slane %v493, 1
      %v1292 = vrot.slane %v489, 2
      %v1293 = vor.u32 %v1291, %v1292
      %v1294 = vsel %vm1267, %v1289, %v1293
      %v1295 = vrot.slane %v501, 1
      %v1296 = vrot.slane %v497, 2
      %v1297 = vor.u32 %v1295, %v1296
      %v1298 = vsel %vm1267, %v1293, %v1297
      %v1299 = vrot.slane %v509, 1
      %v1300 = vrot.slane %v505, 2
      %v1301 = vor.u32 %v1299, %v1300
      %v1302 = vsel %vm1267, %v1297, %v1301
      %v1303 = vrot.slane %v517, 1
      %v1304 = vrot.slane %v513, 2
      %v1305 = vor.u32 %v1303, %v1304
      %v1306 = vsel %vm1267, %v1301, %v1305
      %v1307 = vrot.slane %v525, 1
      %v1308 = vrot.slane %v521, 2
      %v1309 = vor.u32 %v1307, %v1308
      %v1310 = vsel %vm1267, %v1305, %v1309
      %v1311 = vrot.slane %v533, 1
      %v1312 = vrot.slane %v529, 2
      %v1313 = vor.u32 %v1311, %v1312
      %v1314 = vsel %vm1267, %v1309, %v1313
      %v1315 = vrot.slane %v541, 1
      %v1316 = vrot.slane %v537, 2
      %v1317 = vor.u32 %v1315, %v1316
      %v1318 = vsel %vm1267, %v1313, %v1317
      %v1319 = vrot.slane %v549, 1
      %v1320 = vrot.slane %v545, 2
      %v1321 = vor.u32 %v1319, %v1320
      %v1322 = vsel %vm1267, %v1317, %v1321
      %v1323 = vrot.slane %v557, 1
      %v1324 = vrot.slane %v553, 2
      %v1325 = vor.u32 %v1323, %v1324
      %v1326 = vsel %vm1267, %v1321, %v1325
      %v1327 = vrot.slane %v565, 1
      %v1328 = vrot.slane %v561, 2
      %v1329 = vor.u32 %v1327, %v1328
      %v1330 = vsel %vm1267, %v1325, %v1329
      %v1331 = vrot.slane %v573, 1
      %v1332 = vrot.slane %v569, 2
      %v1333 = vor.u32 %v1331, %v1332
      %v1334 = vsel %vm1267, %v1329, %v1333
      %v1336 = vshrl.u32 %v1115, 16
      %v1338 = vrot.slane %v1336, 1
      %v1339 = vshll.u32 %v1115, 16
      %v1341 = vrot.slane %v1339, 2
      %v1342 = vor.u32 %v1338, %v1341
      %v1343 = vsel %vm1267, %v1333, %v1342
      %v1345 = vshrl.u32 %v1116, 16
      %v1347 = vrot.slane %v1345, 1
      %v1348 = vshll.u32 %v1116, 16
      %v1350 = vrot.slane %v1348, 2
      %v1351 = vor.u32 %v1347, %v1350
      %v1352 = vsel %vm1267, %v1342, %v1351
      %v1354 = vsel %vm581, %v1274, 0
      %v1357 = vsel %vm581, %v1278, 0
      %v1360 = vsel %vm581, %v1282, 0
      %v1363 = vsel %vm581, %v1286, 0
      %v1366 = vsel %vm581, %v1290, 0
      %v1369 = vsel %vm581, %v1294, 0
      %v1372 = vsel %vm581, %v1298, 0
      %v1375 = vsel %vm581, %v1302, 0
      %v1378 = vsel %vm581, %v1306, 0
      %v1381 = vsel %vm581, %v1310, 0
      %v1384 = vsel %vm581, %v1314, 0
      %v1387 = vsel %vm581, %v1318, 0
      %v1390 = vsel %vm581, %v1322, 0
      %v1393 = vsel %vm581, %v1326, 0
      %v1396 = vsel %vm581, %v1330, 0
      %v1399 = vsel %vm581, %v1334, 0
      %v1402 = vsel %vm581, %v1343, 0
      %v1405 = vsel %vm581, %v1352, 0
      %v1408 = vsel %vm636, %v1266, 0
      %1410 = vmatpush.bf16.msra.mxu0 0
      %1411 = vmatpush.bf16.msra.mxu0 0
      %1412 = vmatpush.bf16.msra.mxu0 0
      %1413 = vmatpush.bf16.msra.mxu0 0
      %1414 = vmatpush.bf16.msra.mxu0 0
      %1415 = vmatpush.bf16.msra.mxu0 0
      %1416 = vmatpush.bf16.msra.mxu0 0
      %1417 = vmatpush.bf16.msra.mxu0 %v1408
      %1418 = vmatmul.bf16.gmra.mxu0 %v1354
      %v1419 = vpop.f32.mrf.mxu0
      %v1420 = vadd.f32 0.0, %v1419
      %v1421 = vpop.f32.mrf.mxu0
      %v1422 = vadd.f32 0.0, %v1421
      %1423 = vmatmul.bf16.gmra.mxu0 %v1357
      %v1424 = vpop.f32.mrf.mxu0
      %v1425 = vadd.f32 0.0, %v1424
      %v1426 = vpop.f32.mrf.mxu0
      %v1427 = vadd.f32 0.0, %v1426
      %1428 = vmatmul.bf16.gmra.mxu0 %v1360
      %v1429 = vpop.f32.mrf.mxu0
      %v1430 = vadd.f32 0.0, %v1429
      %v1431 = vpop.f32.mrf.mxu0
      %v1432 = vadd.f32 0.0, %v1431
      %1433 = vmatmul.bf16.gmra.mxu0 %v1363
      %v1434 = vpop.f32.mrf.mxu0
      %v1435 = vadd.f32 0.0, %v1434
      %v1436 = vpop.f32.mrf.mxu0
      %v1437 = vadd.f32 0.0, %v1436
      %1438 = vmatmul.bf16.gmra.mxu0 %v1366
      %v1439 = vpop.f32.mrf.mxu0
      %v1440 = vadd.f32 0.0, %v1439
      %v1441 = vpop.f32.mrf.mxu0
      %v1442 = vadd.f32 0.0, %v1441
      %1443 = vmatmul.bf16.gmra.mxu0 %v1369
      %v1444 = vpop.f32.mrf.mxu0
      %v1445 = vadd.f32 0.0, %v1444
      %v1446 = vpop.f32.mrf.mxu0
      %v1447 = vadd.f32 0.0, %v1446
      %1448 = vmatmul.bf16.gmra.mxu0 %v1372
      %v1449 = vpop.f32.mrf.mxu0
      %v1450 = vadd.f32 0.0, %v1449
      %v1451 = vpop.f32.mrf.mxu0
      %v1452 = vadd.f32 0.0, %v1451
      %1453 = vmatmul.bf16.gmra.mxu0 %v1375
      %v1454 = vpop.f32.mrf.mxu0
      %v1455 = vadd.f32 0.0, %v1454
      %v1456 = vpop.f32.mrf.mxu0
      %v1457 = vadd.f32 0.0, %v1456
      %1458 = vmatmul.bf16.gmra.mxu0 %v1378
      %v1459 = vpop.f32.mrf.mxu0
      %v1460 = vadd.f32 0.0, %v1459
      %v1461 = vpop.f32.mrf.mxu0
      %v1462 = vadd.f32 0.0, %v1461
      %1463 = vmatmul.bf16.gmra.mxu0 %v1381
      %v1464 = vpop.f32.mrf.mxu0
      %v1465 = vadd.f32 0.0, %v1464
      %v1466 = vpop.f32.mrf.mxu0
      %v1467 = vadd.f32 0.0, %v1466
      %1468 = vmatmul.bf16.gmra.mxu0 %v1384
      %v1469 = vpop.f32.mrf.mxu0
      %v1470 = vadd.f32 0.0, %v1469
      %v1471 = vpop.f32.mrf.mxu0
      %v1472 = vadd.f32 0.0, %v1471
      %1473 = vmatmul.bf16.gmra.mxu0 %v1387
      %v1474 = vpop.f32.mrf.mxu0
      %v1475 = vadd.f32 0.0, %v1474
      %v1476 = vpop.f32.mrf.mxu0
      %v1477 = vadd.f32 0.0, %v1476
      %1478 = vmatmul.bf16.gmra.mxu0 %v1390
      %v1479 = vpop.f32.mrf.mxu0
      %v1480 = vadd.f32 0.0, %v1479
      %v1481 = vpop.f32.mrf.mxu0
      %v1482 = vadd.f32 0.0, %v1481
      %1483 = vmatmul.bf16.gmra.mxu0 %v1393
      %v1484 = vpop.f32.mrf.mxu0
      %v1485 = vadd.f32 0.0, %v1484
      %v1486 = vpop.f32.mrf.mxu0
      %v1487 = vadd.f32 0.0, %v1486
      %1488 = vmatmul.bf16.gmra.mxu0 %v1396
      %v1489 = vpop.f32.mrf.mxu0
      %v1490 = vadd.f32 0.0, %v1489
      %v1491 = vpop.f32.mrf.mxu0
      %v1492 = vadd.f32 0.0, %v1491
      %1493 = vmatmul.bf16.gmra.mxu0 %v1399
      %v1494 = vpop.f32.mrf.mxu0
      %v1495 = vadd.f32 0.0, %v1494
      %v1496 = vpop.f32.mrf.mxu0
      %v1497 = vadd.f32 0.0, %v1496
      %1498 = vmatmul.bf16.gmra.mxu0 %v1402
      %v1499 = vpop.f32.mrf.mxu0
      %v1500 = vadd.f32 0.0, %v1499
      %v1501 = vpop.f32.mrf.mxu0
      %v1502 = vadd.f32 0.0, %v1501
      %1503 = vmatmul.bf16.gmra.mxu0 %v1405
      %v1504 = vpop.f32.mrf.mxu0
      %v1505 = vadd.f32 0.0, %v1504
      %v1506 = vpop.f32.mrf.mxu0
      %v1507 = vadd.f32 0.0, %v1506
      %1508 = vdwg.mxu0
      %v1509 = vadd.f32 %v1229, %v1420
      %v1510 = vadd.f32 %v1230, %v1422
      %v1511 = vadd.f32 %v1231, %v1425
      %v1512 = vadd.f32 %v1232, %v1427
      %v1513 = vadd.f32 %v1233, %v1430
      %v1514 = vadd.f32 %v1234, %v1432
      %v1515 = vadd.f32 %v1235, %v1435
      %v1516 = vadd.f32 %v1236, %v1437
      %v1517 = vadd.f32 %v1237, %v1440
      %v1518 = vadd.f32 %v1238, %v1442
      %v1519 = vadd.f32 %v1239, %v1445
      %v1520 = vadd.f32 %v1240, %v1447
      %v1521 = vadd.f32 %v1241, %v1450
      %v1522 = vadd.f32 %v1242, %v1452
      %v1523 = vadd.f32 %v1243, %v1455
      %v1524 = vadd.f32 %v1244, %v1457
      %v1525 = vadd.f32 %v1245, %v1460
      %v1526 = vadd.f32 %v1246, %v1462
      %v1527 = vadd.f32 %v1247, %v1465
      %v1528 = vadd.f32 %v1248, %v1467
      %v1529 = vadd.f32 %v1249, %v1470
      %v1530 = vadd.f32 %v1250, %v1472
      %v1531 = vadd.f32 %v1251, %v1475
      %v1532 = vadd.f32 %v1252, %v1477
      %v1533 = vadd.f32 %v1253, %v1480
      %v1534 = vadd.f32 %v1254, %v1482
      %v1535 = vadd.f32 %v1255, %v1485
      %v1536 = vadd.f32 %v1256, %v1487
      %v1537 = vadd.f32 %v1257, %v1490
      %v1538 = vadd.f32 %v1258, %v1492
      %v1539 = vadd.f32 %v1259, %v1495
      %v1540 = vadd.f32 %v1260, %v1497
      %v1541 = vadd.f32 %v1261, %v1500
      %v1542 = vadd.f32 %v1262, %v1502
      %v1543 = vadd.f32 %v1263, %v1505
      %v1544 = vadd.f32 %v1264, %v1507
      %s1545 = scalar_lea.vmem %s275, 20
      %v1546 = vld [vmem:[%s1545] sm:$0xf]
      %vm1547 = vcmask 1045504
      %v1548 = vrot.slane %v414, 2
      %v1549 = vrot.slane %v415, 2
      %v1550 = vsel %vm1547, %v1548, %v1549
      %v1551 = vrot.slane %v416, 2
      %v1552 = vsel %vm1547, %v1549, %v1551
      %v1553 = vrot.slane %v417, 2
      %v1554 = vsel %vm1547, %v1551, %v1553
      %v1555 = vrot.slane %v418, 2
      %v1556 = vsel %vm1547, %v1553, %v1555
      %v1557 = vrot.slane %v419, 2
      %v1558 = vsel %vm1547, %v1555, %v1557
      %v1559 = vrot.slane %v420, 2
      %v1560 = vsel %vm1547, %v1557, %v1559
      %v1561 = vrot.slane %v421, 2
      %v1562 = vsel %vm1547, %v1559, %v1561
      %v1563 = vrot.slane %v422, 2
      %v1564 = vsel %vm1547, %v1561, %v1563
      %v1565 = vrot.slane %v423, 2
      %v1566 = vsel %vm1547, %v1563, %v1565
      %v1567 = vrot.slane %v424, 2
      %v1568 = vsel %vm1547, %v1565, %v1567
      %v1569 = vrot.slane %v425, 2
      %v1570 = vsel %vm1547, %v1567, %v1569
      %v1571 = vrot.slane %v426, 2
      %v1572 = vsel %vm1547, %v1569, %v1571
      %v1573 = vrot.slane %v427, 2
      %v1574 = vsel %vm1547, %v1571, %v1573
      %v1575 = vrot.slane %v428, 2
      %v1576 = vsel %vm1547, %v1573, %v1575
      %v1577 = vrot.slane %v429, 2
      %v1578 = vsel %vm1547, %v1575, %v1577
      %v1579 = vrot.slane %v430, 2
      %v1580 = vsel %vm1547, %v1577, %v1579
      %v1581 = vrot.slane %v1115, 2
      %v1582 = vsel %vm1547, %v1579, %v1581
      %v1583 = vrot.slane %v1116, 2
      %v1584 = vsel %vm1547, %v1581, %v1583
      %v1586 = vsel %vm581, %v1550, 0
      %v1589 = vsel %vm581, %v1552, 0
      %v1592 = vsel %vm581, %v1554, 0
      %v1595 = vsel %vm581, %v1556, 0
      %v1598 = vsel %vm581, %v1558, 0
      %v1601 = vsel %vm581, %v1560, 0
      %v1604 = vsel %vm581, %v1562, 0
      %v1607 = vsel %vm581, %v1564, 0
      %v1610 = vsel %vm581, %v1566, 0
      %v1613 = vsel %vm581, %v1568, 0
      %v1616 = vsel %vm581, %v1570, 0
      %v1619 = vsel %vm581, %v1572, 0
      %v1622 = vsel %vm581, %v1574, 0
      %v1625 = vsel %vm581, %v1576, 0
      %v1628 = vsel %vm581, %v1578, 0
      %v1631 = vsel %vm581, %v1580, 0
      %v1634 = vsel %vm581, %v1582, 0
      %v1637 = vsel %vm581, %v1584, 0
      %v1640 = vsel %vm636, %v1546, 0
      %1642 = vmatpush.bf16.msra.mxu0 0
      %1643 = vmatpush.bf16.msra.mxu0 0
      %1644 = vmatpush.bf16.msra.mxu0 0
      %1645 = vmatpush.bf16.msra.mxu0 0
      %1646 = vmatpush.bf16.msra.mxu0 0
      %1647 = vmatpush.bf16.msra.mxu0 0
      %1648 = vmatpush.bf16.msra.mxu0 0
      %1649 = vmatpush.bf16.msra.mxu0 %v1640
      %1650 = vmatmul.bf16.gmra.mxu0 %v1586
      %v1651 = vpop.f32.mrf.mxu0
      %v1652 = vadd.f32 0.0, %v1651
      %v1653 = vpop.f32.mrf.mxu0
      %v1654 = vadd.f32 0.0, %v1653
      %1655 = vmatmul.bf16.gmra.mxu0 %v1589
      %v1656 = vpop.f32.mrf.mxu0
      %v1657 = vadd.f32 0.0, %v1656
      %v1658 = vpop.f32.mrf.mxu0
      %v1659 = vadd.f32 0.0, %v1658
      %1660 = vmatmul.bf16.gmra.mxu0 %v1592
      %v1661 = vpop.f32.mrf.mxu0
      %v1662 = vadd.f32 0.0, %v1661
      %v1663 = vpop.f32.mrf.mxu0
      %v1664 = vadd.f32 0.0, %v1663
      %1665 = vmatmul.bf16.gmra.mxu0 %v1595
      %v1666 = vpop.f32.mrf.mxu0
      %v1667 = vadd.f32 0.0, %v1666
      %v1668 = vpop.f32.mrf.mxu0
      %v1669 = vadd.f32 0.0, %v1668
      %1670 = vmatmul.bf16.gmra.mxu0 %v1598
      %v1671 = vpop.f32.mrf.mxu0
      %v1672 = vadd.f32 0.0, %v1671
      %v1673 = vpop.f32.mrf.mxu0
      %v1674 = vadd.f32 0.0, %v1673
      %1675 = vmatmul.bf16.gmra.mxu0 %v1601
      %v1676 = vpop.f32.mrf.mxu0
      %v1677 = vadd.f32 0.0, %v1676
      %v1678 = vpop.f32.mrf.mxu0
      %v1679 = vadd.f32 0.0, %v1678
      %1680 = vmatmul.bf16.gmra.mxu0 %v1604
      %v1681 = vpop.f32.mrf.mxu0
      %v1682 = vadd.f32 0.0, %v1681
      %v1683 = vpop.f32.mrf.mxu0
      %v1684 = vadd.f32 0.0, %v1683
      %1685 = vmatmul.bf16.gmra.mxu0 %v1607
      %v1686 = vpop.f32.mrf.mxu0
      %v1687 = vadd.f32 0.0, %v1686
      %v1688 = vpop.f32.mrf.mxu0
      %v1689 = vadd.f32 0.0, %v1688
      %1690 = vmatmul.bf16.gmra.mxu0 %v1610
      %v1691 = vpop.f32.mrf.mxu0
      %v1692 = vadd.f32 0.0, %v1691
      %v1693 = vpop.f32.mrf.mxu0
      %v1694 = vadd.f32 0.0, %v1693
      %1695 = vmatmul.bf16.gmra.mxu0 %v1613
      %v1696 = vpop.f32.mrf.mxu0
      %v1697 = vadd.f32 0.0, %v1696
      %v1698 = vpop.f32.mrf.mxu0
      %v1699 = vadd.f32 0.0, %v1698
      %1700 = vmatmul.bf16.gmra.mxu0 %v1616
      %v1701 = vpop.f32.mrf.mxu0
      %v1702 = vadd.f32 0.0, %v1701
      %v1703 = vpop.f32.mrf.mxu0
      %v1704 = vadd.f32 0.0, %v1703
      %1705 = vmatmul.bf16.gmra.mxu0 %v1619
      %v1706 = vpop.f32.mrf.mxu0
      %v1707 = vadd.f32 0.0, %v1706
      %v1708 = vpop.f32.mrf.mxu0
      %v1709 = vadd.f32 0.0, %v1708
      %1710 = vmatmul.bf16.gmra.mxu0 %v1622
      %v1711 = vpop.f32.mrf.mxu0
      %v1712 = vadd.f32 0.0, %v1711
      %v1713 = vpop.f32.mrf.mxu0
      %v1714 = vadd.f32 0.0, %v1713
      %1715 = vmatmul.bf16.gmra.mxu0 %v1625
      %v1716 = vpop.f32.mrf.mxu0
      %v1717 = vadd.f32 0.0, %v1716
      %v1718 = vpop.f32.mrf.mxu0
      %v1719 = vadd.f32 0.0, %v1718
      %1720 = vmatmul.bf16.gmra.mxu0 %v1628
      %v1721 = vpop.f32.mrf.mxu0
      %v1722 = vadd.f32 0.0, %v1721
      %v1723 = vpop.f32.mrf.mxu0
      %v1724 = vadd.f32 0.0, %v1723
      %1725 = vmatmul.bf16.gmra.mxu0 %v1631
      %v1726 = vpop.f32.mrf.mxu0
      %v1727 = vadd.f32 0.0, %v1726
      %v1728 = vpop.f32.mrf.mxu0
      %v1729 = vadd.f32 0.0, %v1728
      %1730 = vmatmul.bf16.gmra.mxu0 %v1634
      %v1731 = vpop.f32.mrf.mxu0
      %v1732 = vadd.f32 0.0, %v1731
      %v1733 = vpop.f32.mrf.mxu0
      %v1734 = vadd.f32 0.0, %v1733
      %1735 = vmatmul.bf16.gmra.mxu0 %v1637
      %v1736 = vpop.f32.mrf.mxu0
      %v1737 = vadd.f32 0.0, %v1736
      %v1738 = vpop.f32.mrf.mxu0
      %v1739 = vadd.f32 0.0, %v1738
      %1740 = vdwg.mxu0
      %v1741 = vadd.f32 %v1509, %v1652
      %v1742 = vadd.f32 %v1510, %v1654
      %v1743 = vadd.f32 %v1511, %v1657
      %v1744 = vadd.f32 %v1512, %v1659
      %v1745 = vadd.f32 %v1513, %v1662
      %v1746 = vadd.f32 %v1514, %v1664
      %v1747 = vadd.f32 %v1515, %v1667
      %v1748 = vadd.f32 %v1516, %v1669
      %v1749 = vadd.f32 %v1517, %v1672
      %v1750 = vadd.f32 %v1518, %v1674
      %v1751 = vadd.f32 %v1519, %v1677
      %v1752 = vadd.f32 %v1520, %v1679
      %v1753 = vadd.f32 %v1521, %v1682
      %v1754 = vadd.f32 %v1522, %v1684
      %v1755 = vadd.f32 %v1523, %v1687
      %v1756 = vadd.f32 %v1524, %v1689
      %v1757 = vadd.f32 %v1525, %v1692
      %v1758 = vadd.f32 %v1526, %v1694
      %v1759 = vadd.f32 %v1527, %v1697
      %v1760 = vadd.f32 %v1528, %v1699
      %v1761 = vadd.f32 %v1529, %v1702
      %v1762 = vadd.f32 %v1530, %v1704
      %v1763 = vadd.f32 %v1531, %v1707
      %v1764 = vadd.f32 %v1532, %v1709
      %v1765 = vadd.f32 %v1533, %v1712
      %v1766 = vadd.f32 %v1534, %v1714
      %v1767 = vadd.f32 %v1535, %v1717
      %v1768 = vadd.f32 %v1536, %v1719
      %v1769 = vadd.f32 %v1537, %v1722
      %v1770 = vadd.f32 %v1538, %v1724
      %v1771 = vadd.f32 %v1539, %v1727
      %v1772 = vadd.f32 %v1540, %v1729
      %v1773 = vadd.f32 %v1541, %v1732
      %v1774 = vadd.f32 %v1542, %v1734
      %v1775 = vadd.f32 %v1543, %v1737
      %v1776 = vadd.f32 %v1544, %v1739
      %s1777 = scalar_lea.vmem %s275, 24
      %v1778 = vld [vmem:[%s1777] sm:$0xf]
      %v1781 = vunpack.c.l.b16 %v334
      %v1782 = vunpack.c.l.b16 %v335
      %v1783 = vpack.c.b16 %v1781, %v1114
      %v1784 = vpack.c.b16 %v1782, %v1782
      %v1785 = vrot.slane %v1783, 2
      %v1786 = vsel %vm1547, %v1581, %v1785
      %v1787 = vrot.slane %v1784, 2
      %v1788 = vsel %vm1547, %v1785, %v1787
      %v1790 = vsel %vm581, %v1786, 0
      %v1793 = vsel %vm581, %v1788, 0
      %v1796 = vsel %vm636, %v1778, 0
      %1798 = vmatpush.bf16.msra.mxu0 0
      %1799 = vmatpush.bf16.msra.mxu0 0
      %1800 = vmatpush.bf16.msra.mxu0 0
      %1801 = vmatpush.bf16.msra.mxu0 0
      %1802 = vmatpush.bf16.msra.mxu0 0
      %1803 = vmatpush.bf16.msra.mxu0 0
      %1804 = vmatpush.bf16.msra.mxu0 0
      %1805 = vmatpush.bf16.msra.mxu0 %v1796
      %1806 = vmatmul.bf16.gmra.mxu0 %v1589
      %v1807 = vpop.f32.mrf.mxu0
      %v1808 = vadd.f32 0.0, %v1807
      %v1809 = vpop.f32.mrf.mxu0
      %v1810 = vadd.f32 0.0, %v1809
      %1811 = vmatmul.bf16.gmra.mxu0 %v1592
      %v1812 = vpop.f32.mrf.mxu0
      %v1813 = vadd.f32 0.0, %v1812
      %v1814 = vpop.f32.mrf.mxu0
      %v1815 = vadd.f32 0.0, %v1814
      %1816 = vmatmul.bf16.gmra.mxu0 %v1595
      %v1817 = vpop.f32.mrf.mxu0
      %v1818 = vadd.f32 0.0, %v1817
      %v1819 = vpop.f32.mrf.mxu0
      %v1820 = vadd.f32 0.0, %v1819
      %1821 = vmatmul.bf16.gmra.mxu0 %v1598
      %v1822 = vpop.f32.mrf.mxu0
      %v1823 = vadd.f32 0.0, %v1822
      %v1824 = vpop.f32.mrf.mxu0
      %v1825 = vadd.f32 0.0, %v1824
      %1826 = vmatmul.bf16.gmra.mxu0 %v1601
      %v1827 = vpop.f32.mrf.mxu0
      %v1828 = vadd.f32 0.0, %v1827
      %v1829 = vpop.f32.mrf.mxu0
      %v1830 = vadd.f32 0.0, %v1829
      %1831 = vmatmul.bf16.gmra.mxu0 %v1604
      %v1832 = vpop.f32.mrf.mxu0
      %v1833 = vadd.f32 0.0, %v1832
      %v1834 = vpop.f32.mrf.mxu0
      %v1835 = vadd.f32 0.0, %v1834
      %1836 = vmatmul.bf16.gmra.mxu0 %v1607
      %v1837 = vpop.f32.mrf.mxu0
      %v1838 = vadd.f32 0.0, %v1837
      %v1839 = vpop.f32.mrf.mxu0
      %v1840 = vadd.f32 0.0, %v1839
      %1841 = vmatmul.bf16.gmra.mxu0 %v1610
      %v1842 = vpop.f32.mrf.mxu0
      %v1843 = vadd.f32 0.0, %v1842
      %v1844 = vpop.f32.mrf.mxu0
      %v1845 = vadd.f32 0.0, %v1844
      %1846 = vmatmul.bf16.gmra.mxu0 %v1613
      %v1847 = vpop.f32.mrf.mxu0
      %v1848 = vadd.f32 0.0, %v1847
      %v1849 = vpop.f32.mrf.mxu0
      %v1850 = vadd.f32 0.0, %v1849
      %1851 = vmatmul.bf16.gmra.mxu0 %v1616
      %v1852 = vpop.f32.mrf.mxu0
      %v1853 = vadd.f32 0.0, %v1852
      %v1854 = vpop.f32.mrf.mxu0
      %v1855 = vadd.f32 0.0, %v1854
      %1856 = vmatmul.bf16.gmra.mxu0 %v1619
      %v1857 = vpop.f32.mrf.mxu0
      %v1858 = vadd.f32 0.0, %v1857
      %v1859 = vpop.f32.mrf.mxu0
      %v1860 = vadd.f32 0.0, %v1859
      %1861 = vmatmul.bf16.gmra.mxu0 %v1622
      %v1862 = vpop.f32.mrf.mxu0
      %v1863 = vadd.f32 0.0, %v1862
      %v1864 = vpop.f32.mrf.mxu0
      %v1865 = vadd.f32 0.0, %v1864
      %1866 = vmatmul.bf16.gmra.mxu0 %v1625
      %v1867 = vpop.f32.mrf.mxu0
      %v1868 = vadd.f32 0.0, %v1867
      %v1869 = vpop.f32.mrf.mxu0
      %v1870 = vadd.f32 0.0, %v1869
      %1871 = vmatmul.bf16.gmra.mxu0 %v1628
      %v1872 = vpop.f32.mrf.mxu0
      %v1873 = vadd.f32 0.0, %v1872
      %v1874 = vpop.f32.mrf.mxu0
      %v1875 = vadd.f32 0.0, %v1874
      %1876 = vmatmul.bf16.gmra.mxu0 %v1631
      %v1877 = vpop.f32.mrf.mxu0
      %v1878 = vadd.f32 0.0, %v1877
      %v1879 = vpop.f32.mrf.mxu0
      %v1880 = vadd.f32 0.0, %v1879
      %1881 = vmatmul.bf16.gmra.mxu0 %v1634
      %v1882 = vpop.f32.mrf.mxu0
      %v1883 = vadd.f32 0.0, %v1882
      %v1884 = vpop.f32.mrf.mxu0
      %v1885 = vadd.f32 0.0, %v1884
      %1886 = vmatmul.bf16.gmra.mxu0 %v1790
      %v1887 = vpop.f32.mrf.mxu0
      %v1888 = vadd.f32 0.0, %v1887
      %v1889 = vpop.f32.mrf.mxu0
      %v1890 = vadd.f32 0.0, %v1889
      %1891 = vmatmul.bf16.gmra.mxu0 %v1793
      %v1892 = vpop.f32.mrf.mxu0
      %v1893 = vadd.f32 0.0, %v1892
      %v1894 = vpop.f32.mrf.mxu0
      %v1895 = vadd.f32 0.0, %v1894
      %1896 = vdwg.mxu0
      %v1897 = vadd.f32 %v1741, %v1808
      %v1898 = vadd.f32 %v1742, %v1810
      %v1899 = vadd.f32 %v1743, %v1813
      %v1900 = vadd.f32 %v1744, %v1815
      %v1901 = vadd.f32 %v1745, %v1818
      %v1902 = vadd.f32 %v1746, %v1820
      %v1903 = vadd.f32 %v1747, %v1823
      %v1904 = vadd.f32 %v1748, %v1825
      %v1905 = vadd.f32 %v1749, %v1828
      %v1906 = vadd.f32 %v1750, %v1830
      %v1907 = vadd.f32 %v1751, %v1833
      %v1908 = vadd.f32 %v1752, %v1835
      %v1909 = vadd.f32 %v1753, %v1838
      %v1910 = vadd.f32 %v1754, %v1840
      %v1911 = vadd.f32 %v1755, %v1843
      %v1912 = vadd.f32 %v1756, %v1845
      %v1913 = vadd.f32 %v1757, %v1848
      %v1914 = vadd.f32 %v1758, %v1850
      %v1915 = vadd.f32 %v1759, %v1853
      %v1916 = vadd.f32 %v1760, %v1855
      %v1917 = vadd.f32 %v1761, %v1858
      %v1918 = vadd.f32 %v1762, %v1860
      %v1919 = vadd.f32 %v1763, %v1863
      %v1920 = vadd.f32 %v1764, %v1865
      %v1921 = vadd.f32 %v1765, %v1868
      %v1922 = vadd.f32 %v1766, %v1870
      %v1923 = vadd.f32 %v1767, %v1873
      %v1924 = vadd.f32 %v1768, %v1875
      %v1925 = vadd.f32 %v1769, %v1878
      %v1926 = vadd.f32 %v1770, %v1880
      %v1927 = vadd.f32 %v1771, %v1883
      %v1928 = vadd.f32 %v1772, %v1885
      %v1929 = vadd.f32 %v1773, %v1888
      %v1930 = vadd.f32 %v1774, %v1890
      %v1931 = vadd.f32 %v1775, %v1893
      %v1932 = vadd.f32 %v1776, %v1895
      %s1933 = scalar_lea.vmem %s275, 28
      %v1934 = vld [vmem:[%s1933] sm:$0xf]
      %vm1935 = vsmask.f32 5376
      %v1936 = vrot.slane %v453, 2
      %v1937 = vrot.slane %v449, 3
      %v1938 = vor.u32 %v1936, %v1937
      %v1939 = vrot.slane %v461, 2
      %v1940 = vrot.slane %v457, 3
      %v1941 = vor.u32 %v1939, %v1940
      %v1942 = vsel %vm1935, %v1938, %v1941
      %v1943 = vrot.slane %v469, 2
      %v1944 = vrot.slane %v465, 3
      %v1945 = vor.u32 %v1943, %v1944
      %v1946 = vsel %vm1935, %v1941, %v1945
      %v1947 = vrot.slane %v477, 2
      %v1948 = vrot.slane %v473, 3
      %v1949 = vor.u32 %v1947, %v1948
      %v1950 = vsel %vm1935, %v1945, %v1949
      %v1951 = vrot.slane %v485, 2
      %v1952 = vrot.slane %v481, 3
      %v1953 = vor.u32 %v1951, %v1952
      %v1954 = vsel %vm1935, %v1949, %v1953
      %v1955 = vrot.slane %v493, 2
      %v1956 = vrot.slane %v489, 3
      %v1957 = vor.u32 %v1955, %v1956
      %v1958 = vsel %vm1935, %v1953, %v1957
      %v1959 = vrot.slane %v501, 2
      %v1960 = vrot.slane %v497, 3
      %v1961 = vor.u32 %v1959, %v1960
      %v1962 = vsel %vm1935, %v1957, %v1961
      %v1963 = vrot.slane %v509, 2
      %v1964 = vrot.slane %v505, 3
      %v1965 = vor.u32 %v1963, %v1964
      %v1966 = vsel %vm1935, %v1961, %v1965
      %v1967 = vrot.slane %v517, 2
      %v1968 = vrot.slane %v513, 3
      %v1969 = vor.u32 %v1967, %v1968
      %v1970 = vsel %vm1935, %v1965, %v1969
      %v1971 = vrot.slane %v525, 2
      %v1972 = vrot.slane %v521, 3
      %v1973 = vor.u32 %v1971, %v1972
      %v1974 = vsel %vm1935, %v1969, %v1973
      %v1975 = vrot.slane %v533, 2
      %v1976 = vrot.slane %v529, 3
      %v1977 = vor.u32 %v1975, %v1976
      %v1978 = vsel %vm1935, %v1973, %v1977
      %v1979 = vrot.slane %v541, 2
      %v1980 = vrot.slane %v537, 3
      %v1981 = vor.u32 %v1979, %v1980
      %v1982 = vsel %vm1935, %v1977, %v1981
      %v1983 = vrot.slane %v549, 2
      %v1984 = vrot.slane %v545, 3
      %v1985 = vor.u32 %v1983, %v1984
      %v1986 = vsel %vm1935, %v1981, %v1985
      %v1987 = vrot.slane %v557, 2
      %v1988 = vrot.slane %v553, 3
      %v1989 = vor.u32 %v1987, %v1988
      %v1990 = vsel %vm1935, %v1985, %v1989
      %v1991 = vrot.slane %v565, 2
      %v1992 = vrot.slane %v561, 3
      %v1993 = vor.u32 %v1991, %v1992
      %v1994 = vsel %vm1935, %v1989, %v1993
      %v1995 = vrot.slane %v573, 2
      %v1996 = vrot.slane %v569, 3
      %v1997 = vor.u32 %v1995, %v1996
      %v1998 = vsel %vm1935, %v1993, %v1997
      %v1999 = vrot.slane %v1336, 2
      %v2000 = vrot.slane %v1339, 3
      %v2001 = vor.u32 %v1999, %v2000
      %v2002 = vsel %vm1935, %v1997, %v2001
      %v2004 = vshrl.u32 %v1783, 16
      %v2006 = vrot.slane %v2004, 2
      %v2007 = vshll.u32 %v1783, 16
      %v2009 = vrot.slane %v2007, 3
      %v2010 = vor.u32 %v2006, %v2009
      %v2011 = vsel %vm1935, %v2001, %v2010
      %v2013 = vshrl.u32 %v1784, 16
      %v2015 = vrot.slane %v2013, 2
      %v2016 = vshll.u32 %v1784, 16
      %v2018 = vrot.slane %v2016, 3
      %v2019 = vor.u32 %v2015, %v2018
      %v2020 = vsel %vm1935, %v2010, %v2019
      %v2022 = vsel %vm581, %v1942, 0
      %v2025 = vsel %vm581, %v1946, 0
      %v2028 = vsel %vm581, %v1950, 0
      %v2031 = vsel %vm581, %v1954, 0
      %v2034 = vsel %vm581, %v1958, 0
      %v2037 = vsel %vm581, %v1962, 0
      %v2040 = vsel %vm581, %v1966, 0
      %v2043 = vsel %vm581, %v1970, 0
      %v2046 = vsel %vm581, %v1974, 0
      %v2049 = vsel %vm581, %v1978, 0
      %v2052 = vsel %vm581, %v1982, 0
      %v2055 = vsel %vm581, %v1986, 0
      %v2058 = vsel %vm581, %v1990, 0
      %v2061 = vsel %vm581, %v1994, 0
      %v2064 = vsel %vm581, %v1998, 0
      %v2067 = vsel %vm581, %v2002, 0
      %v2070 = vsel %vm581, %v2011, 0
      %v2073 = vsel %vm581, %v2020, 0
      %v2076 = vsel %vm636, %v1934, 0
      %2078 = vmatpush.bf16.msra.mxu0 0
      %2079 = vmatpush.bf16.msra.mxu0 0
      %2080 = vmatpush.bf16.msra.mxu0 0
      %2081 = vmatpush.bf16.msra.mxu0 0
      %2082 = vmatpush.bf16.msra.mxu0 0
      %2083 = vmatpush.bf16.msra.mxu0 0
      %2084 = vmatpush.bf16.msra.mxu0 0
      %2085 = vmatpush.bf16.msra.mxu0 %v2076
      %2086 = vmatmul.bf16.gmra.mxu0 %v2022
      %v2087 = vpop.f32.mrf.mxu0
      %v2088 = vadd.f32 0.0, %v2087
      %v2089 = vpop.f32.mrf.mxu0
      %v2090 = vadd.f32 0.0, %v2089
      %2091 = vmatmul.bf16.gmra.mxu0 %v2025
      %v2092 = vpop.f32.mrf.mxu0
      %v2093 = vadd.f32 0.0, %v2092
      %v2094 = vpop.f32.mrf.mxu0
      %v2095 = vadd.f32 0.0, %v2094
      %2096 = vmatmul.bf16.gmra.mxu0 %v2028
      %v2097 = vpop.f32.mrf.mxu0
      %v2098 = vadd.f32 0.0, %v2097
      %v2099 = vpop.f32.mrf.mxu0
      %v2100 = vadd.f32 0.0, %v2099
      %2101 = vmatmul.bf16.gmra.mxu0 %v2031
      %v2102 = vpop.f32.mrf.mxu0
      %v2103 = vadd.f32 0.0, %v2102
      %v2104 = vpop.f32.mrf.mxu0
      %v2105 = vadd.f32 0.0, %v2104
      %2106 = vmatmul.bf16.gmra.mxu0 %v2034
      %v2107 = vpop.f32.mrf.mxu0
      %v2108 = vadd.f32 0.0, %v2107
      %v2109 = vpop.f32.mrf.mxu0
      %v2110 = vadd.f32 0.0, %v2109
      %2111 = vmatmul.bf16.gmra.mxu0 %v2037
      %v2112 = vpop.f32.mrf.mxu0
      %v2113 = vadd.f32 0.0, %v2112
      %v2114 = vpop.f32.mrf.mxu0
      %v2115 = vadd.f32 0.0, %v2114
      %2116 = vmatmul.bf16.gmra.mxu0 %v2040
      %v2117 = vpop.f32.mrf.mxu0
      %v2118 = vadd.f32 0.0, %v2117
      %v2119 = vpop.f32.mrf.mxu0
      %v2120 = vadd.f32 0.0, %v2119
      %2121 = vmatmul.bf16.gmra.mxu0 %v2043
      %v2122 = vpop.f32.mrf.mxu0
      %v2123 = vadd.f32 0.0, %v2122
      %v2124 = vpop.f32.mrf.mxu0
      %v2125 = vadd.f32 0.0, %v2124
      %2126 = vmatmul.bf16.gmra.mxu0 %v2046
      %v2127 = vpop.f32.mrf.mxu0
      %v2128 = vadd.f32 0.0, %v2127
      %v2129 = vpop.f32.mrf.mxu0
      %v2130 = vadd.f32 0.0, %v2129
      %2131 = vmatmul.bf16.gmra.mxu0 %v2049
      %v2132 = vpop.f32.mrf.mxu0
      %v2133 = vadd.f32 0.0, %v2132
      %v2134 = vpop.f32.mrf.mxu0
      %v2135 = vadd.f32 0.0, %v2134
      %2136 = vmatmul.bf16.gmra.mxu0 %v2052
      %v2137 = vpop.f32.mrf.mxu0
      %v2138 = vadd.f32 0.0, %v2137
      %v2139 = vpop.f32.mrf.mxu0
      %v2140 = vadd.f32 0.0, %v2139
      %2141 = vmatmul.bf16.gmra.mxu0 %v2055
      %v2142 = vpop.f32.mrf.mxu0
      %v2143 = vadd.f32 0.0, %v2142
      %v2144 = vpop.f32.mrf.mxu0
      %v2145 = vadd.f32 0.0, %v2144
      %2146 = vmatmul.bf16.gmra.mxu0 %v2058
      %v2147 = vpop.f32.mrf.mxu0
      %v2148 = vadd.f32 0.0, %v2147
      %v2149 = vpop.f32.mrf.mxu0
      %v2150 = vadd.f32 0.0, %v2149
      %2151 = vmatmul.bf16.gmra.mxu0 %v2061
      %v2152 = vpop.f32.mrf.mxu0
      %v2153 = vadd.f32 0.0, %v2152
      %v2154 = vpop.f32.mrf.mxu0
      %v2155 = vadd.f32 0.0, %v2154
      %2156 = vmatmul.bf16.gmra.mxu0 %v2064
      %v2157 = vpop.f32.mrf.mxu0
      %v2158 = vadd.f32 0.0, %v2157
      %v2159 = vpop.f32.mrf.mxu0
      %v2160 = vadd.f32 0.0, %v2159
      %2161 = vmatmul.bf16.gmra.mxu0 %v2067
      %v2162 = vpop.f32.mrf.mxu0
      %v2163 = vadd.f32 0.0, %v2162
      %v2164 = vpop.f32.mrf.mxu0
      %v2165 = vadd.f32 0.0, %v2164
      %2166 = vmatmul.bf16.gmra.mxu0 %v2070
      %v2167 = vpop.f32.mrf.mxu0
      %v2168 = vadd.f32 0.0, %v2167
      %v2169 = vpop.f32.mrf.mxu0
      %v2170 = vadd.f32 0.0, %v2169
      %2171 = vmatmul.bf16.gmra.mxu0 %v2073
      %v2172 = vpop.f32.mrf.mxu0
      %v2173 = vadd.f32 0.0, %v2172
      %v2174 = vpop.f32.mrf.mxu0
      %v2175 = vadd.f32 0.0, %v2174
      %2176 = vdwg.mxu0
      %v2177 = vadd.f32 %v1897, %v2088
      %v2178 = vadd.f32 %v1898, %v2090
      %v2179 = vadd.f32 %v1899, %v2093
      %v2180 = vadd.f32 %v1900, %v2095
      %v2181 = vadd.f32 %v1901, %v2098
      %v2182 = vadd.f32 %v1902, %v2100
      %v2183 = vadd.f32 %v1903, %v2103
      %v2184 = vadd.f32 %v1904, %v2105
      %v2185 = vadd.f32 %v1905, %v2108
      %v2186 = vadd.f32 %v1906, %v2110
      %v2187 = vadd.f32 %v1907, %v2113
      %v2188 = vadd.f32 %v1908, %v2115
      %v2189 = vadd.f32 %v1909, %v2118
      %v2190 = vadd.f32 %v1910, %v2120
      %v2191 = vadd.f32 %v1911, %v2123
      %v2192 = vadd.f32 %v1912, %v2125
      %v2193 = vadd.f32 %v1913, %v2128
      %v2194 = vadd.f32 %v1914, %v2130
      %v2195 = vadd.f32 %v1915, %v2133
      %v2196 = vadd.f32 %v1916, %v2135
      %v2197 = vadd.f32 %v1917, %v2138
      %v2198 = vadd.f32 %v1918, %v2140
      %v2199 = vadd.f32 %v1919, %v2143
      %v2200 = vadd.f32 %v1920, %v2145
      %v2201 = vadd.f32 %v1921, %v2148
      %v2202 = vadd.f32 %v1922, %v2150
      %v2203 = vadd.f32 %v1923, %v2153
      %v2204 = vadd.f32 %v1924, %v2155
      %v2205 = vadd.f32 %v1925, %v2158
      %v2206 = vadd.f32 %v1926, %v2160
      %v2207 = vadd.f32 %v1927, %v2163
      %v2208 = vadd.f32 %v1928, %v2165
      %v2209 = vadd.f32 %v1929, %v2168
      %v2210 = vadd.f32 %v1930, %v2170
      %v2211 = vadd.f32 %v1931, %v2173
      %v2212 = vadd.f32 %v1932, %v2175
      %s2213 = scalar_lea.vmem %s275, 32
      %v2214 = vld [vmem:[%s2213] sm:$0xf]
      %vm2215 = vcmask 1044480
      %v2216 = vrot.slane %v415, 3
      %v2217 = vrot.slane %v416, 3
      %v2218 = vsel %vm2215, %v2216, %v2217
      %v2219 = vrot.slane %v417, 3
      %v2220 = vsel %vm2215, %v2217, %v2219
      %v2221 = vrot.slane %v418, 3
      %v2222 = vsel %vm2215, %v2219, %v2221
      %v2223 = vrot.slane %v419, 3
      %v2224 = vsel %vm2215, %v2221, %v2223
      %v2225 = vrot.slane %v420, 3
      %v2226 = vsel %vm2215, %v2223, %v2225
      %v2227 = vrot.slane %v421, 3
      %v2228 = vsel %vm2215, %v2225, %v2227
      %v2229 = vrot.slane %v422, 3
      %v2230 = vsel %vm2215, %v2227, %v2229
      %v2231 = vrot.slane %v423, 3
      %v2232 = vsel %vm2215, %v2229, %v2231
      %v2233 = vrot.slane %v424, 3
      %v2234 = vsel %vm2215, %v2231, %v2233
      %v2235 = vrot.slane %v425, 3
      %v2236 = vsel %vm2215, %v2233, %v2235
      %v2237 = vrot.slane %v426, 3
      %v2238 = vsel %vm2215, %v2235, %v2237
      %v2239 = vrot.slane %v427, 3
      %v2240 = vsel %vm2215, %v2237, %v2239
      %v2241 = vrot.slane %v428, 3
      %v2242 = vsel %vm2215, %v2239, %v2241
      %v2243 = vrot.slane %v429, 3
      %v2244 = vsel %vm2215, %v2241, %v2243
      %v2245 = vrot.slane %v430, 3
      %v2246 = vsel %vm2215, %v2243, %v2245
      %v2247 = vrot.slane %v1115, 3
      %v2248 = vsel %vm2215, %v2245, %v2247
      %v2249 = vrot.slane %v1783, 3
      %v2250 = vsel %vm2215, %v2247, %v2249
      %v2251 = vrot.slane %v1784, 3
      %v2252 = vsel %vm2215, %v2249, %v2251
      %v2254 = vsel %vm581, %v2218, 0
      %v2257 = vsel %vm581, %v2220, 0
      %v2260 = vsel %vm581, %v2222, 0
      %v2263 = vsel %vm581, %v2224, 0
      %v2266 = vsel %vm581, %v2226, 0
      %v2269 = vsel %vm581, %v2228, 0
      %v2272 = vsel %vm581, %v2230, 0
      %v2275 = vsel %vm581, %v2232, 0
      %v2278 = vsel %vm581, %v2234, 0
      %v2281 = vsel %vm581, %v2236, 0
      %v2284 = vsel %vm581, %v2238, 0
      %v2287 = vsel %vm581, %v2240, 0
      %v2290 = vsel %vm581, %v2242, 0
      %v2293 = vsel %vm581, %v2244, 0
      %v2296 = vsel %vm581, %v2246, 0
      %v2299 = vsel %vm581, %v2248, 0
      %v2302 = vsel %vm581, %v2250, 0
      %v2305 = vsel %vm581, %v2252, 0
      %v2308 = vsel %vm636, %v2214, 0
      %2310 = vmatpush.bf16.msra.mxu0 0
      %2311 = vmatpush.bf16.msra.mxu0 0
      %2312 = vmatpush.bf16.msra.mxu0 0
      %2313 = vmatpush.bf16.msra.mxu0 0
      %2314 = vmatpush.bf16.msra.mxu0 0
      %2315 = vmatpush.bf16.msra.mxu0 0
      %2316 = vmatpush.bf16.msra.mxu0 0
      %2317 = vmatpush.bf16.msra.mxu0 %v2308
      %2318 = vmatmul.bf16.gmra.mxu0 %v2254
      %v2319 = vpop.f32.mrf.mxu0
      %v2320 = vadd.f32 0.0, %v2319
      %v2321 = vpop.f32.mrf.mxu0
      %v2322 = vadd.f32 0.0, %v2321
      %2323 = vmatmul.bf16.gmra.mxu0 %v2257
      %v2324 = vpop.f32.mrf.mxu0
      %v2325 = vadd.f32 0.0, %v2324
      %v2326 = vpop.f32.mrf.mxu0
      %v2327 = vadd.f32 0.0, %v2326
      %2328 = vmatmul.bf16.gmra.mxu0 %v2260
      %v2329 = vpop.f32.mrf.mxu0
      %v2330 = vadd.f32 0.0, %v2329
      %v2331 = vpop.f32.mrf.mxu0
      %v2332 = vadd.f32 0.0, %v2331
      %2333 = vmatmul.bf16.gmra.mxu0 %v2263
      %v2334 = vpop.f32.mrf.mxu0
      %v2335 = vadd.f32 0.0, %v2334
      %v2336 = vpop.f32.mrf.mxu0
      %v2337 = vadd.f32 0.0, %v2336
      %2338 = vmatmul.bf16.gmra.mxu0 %v2266
      %v2339 = vpop.f32.mrf.mxu0
      %v2340 = vadd.f32 0.0, %v2339
      %v2341 = vpop.f32.mrf.mxu0
      %v2342 = vadd.f32 0.0, %v2341
      %2343 = vmatmul.bf16.gmra.mxu0 %v2269
      %v2344 = vpop.f32.mrf.mxu0
      %v2345 = vadd.f32 0.0, %v2344
      %v2346 = vpop.f32.mrf.mxu0
      %v2347 = vadd.f32 0.0, %v2346
      %2348 = vmatmul.bf16.gmra.mxu0 %v2272
      %v2349 = vpop.f32.mrf.mxu0
      %v2350 = vadd.f32 0.0, %v2349
      %v2351 = vpop.f32.mrf.mxu0
      %v2352 = vadd.f32 0.0, %v2351
      %2353 = vmatmul.bf16.gmra.mxu0 %v2275
      %v2354 = vpop.f32.mrf.mxu0
      %v2355 = vadd.f32 0.0, %v2354
      %v2356 = vpop.f32.mrf.mxu0
      %v2357 = vadd.f32 0.0, %v2356
      %2358 = vmatmul.bf16.gmra.mxu0 %v2278
      %v2359 = vpop.f32.mrf.mxu0
      %v2360 = vadd.f32 0.0, %v2359
      %v2361 = vpop.f32.mrf.mxu0
      %v2362 = vadd.f32 0.0, %v2361
      %2363 = vmatmul.bf16.gmra.mxu0 %v2281
      %v2364 = vpop.f32.mrf.mxu0
      %v2365 = vadd.f32 0.0, %v2364
      %v2366 = vpop.f32.mrf.mxu0
      %v2367 = vadd.f32 0.0, %v2366
      %2368 = vmatmul.bf16.gmra.mxu0 %v2284
      %v2369 = vpop.f32.mrf.mxu0
      %v2370 = vadd.f32 0.0, %v2369
      %v2371 = vpop.f32.mrf.mxu0
      %v2372 = vadd.f32 0.0, %v2371
      %2373 = vmatmul.bf16.gmra.mxu0 %v2287
      %v2374 = vpop.f32.mrf.mxu0
      %v2375 = vadd.f32 0.0, %v2374
      %v2376 = vpop.f32.mrf.mxu0
      %v2377 = vadd.f32 0.0, %v2376
      %2378 = vmatmul.bf16.gmra.mxu0 %v2290
      %v2379 = vpop.f32.mrf.mxu0
      %v2380 = vadd.f32 0.0, %v2379
      %v2381 = vpop.f32.mrf.mxu0
      %v2382 = vadd.f32 0.0, %v2381
      %2383 = vmatmul.bf16.gmra.mxu0 %v2293
      %v2384 = vpop.f32.mrf.mxu0
      %v2385 = vadd.f32 0.0, %v2384
      %v2386 = vpop.f32.mrf.mxu0
      %v2387 = vadd.f32 0.0, %v2386
      %2388 = vmatmul.bf16.gmra.mxu0 %v2296
      %v2389 = vpop.f32.mrf.mxu0
      %v2390 = vadd.f32 0.0, %v2389
      %v2391 = vpop.f32.mrf.mxu0
      %v2392 = vadd.f32 0.0, %v2391
      %2393 = vmatmul.bf16.gmra.mxu0 %v2299
      %v2394 = vpop.f32.mrf.mxu0
      %v2395 = vadd.f32 0.0, %v2394
      %v2396 = vpop.f32.mrf.mxu0
      %v2397 = vadd.f32 0.0, %v2396
      %2398 = vmatmul.bf16.gmra.mxu0 %v2302
      %v2399 = vpop.f32.mrf.mxu0
      %v2400 = vadd.f32 0.0, %v2399
      %v2401 = vpop.f32.mrf.mxu0
      %v2402 = vadd.f32 0.0, %v2401
      %2403 = vmatmul.bf16.gmra.mxu0 %v2305
      %v2404 = vpop.f32.mrf.mxu0
      %v2405 = vadd.f32 0.0, %v2404
      %v2406 = vpop.f32.mrf.mxu0
      %v2407 = vadd.f32 0.0, %v2406
      %2408 = vdwg.mxu0
      %v2409 = vadd.f32 %v2177, %v2320
      %v2410 = vadd.f32 %v2178, %v2322
      %v2411 = vadd.f32 %v2179, %v2325
      %v2412 = vadd.f32 %v2180, %v2327
      %v2413 = vadd.f32 %v2181, %v2330
      %v2414 = vadd.f32 %v2182, %v2332
      %v2415 = vadd.f32 %v2183, %v2335
      %v2416 = vadd.f32 %v2184, %v2337
      %v2417 = vadd.f32 %v2185, %v2340
      %v2418 = vadd.f32 %v2186, %v2342
      %v2419 = vadd.f32 %v2187, %v2345
      %v2420 = vadd.f32 %v2188, %v2347
      %v2421 = vadd.f32 %v2189, %v2350
      %v2422 = vadd.f32 %v2190, %v2352
      %v2423 = vadd.f32 %v2191, %v2355
      %v2424 = vadd.f32 %v2192, %v2357
      %v2425 = vadd.f32 %v2193, %v2360
      %v2426 = vadd.f32 %v2194, %v2362
      %v2427 = vadd.f32 %v2195, %v2365
      %v2428 = vadd.f32 %v2196, %v2367
      %v2429 = vadd.f32 %v2197, %v2370
      %v2430 = vadd.f32 %v2198, %v2372
      %v2431 = vadd.f32 %v2199, %v2375
      %v2432 = vadd.f32 %v2200, %v2377
      %v2433 = vadd.f32 %v2201, %v2380
      %v2434 = vadd.f32 %v2202, %v2382
      %v2435 = vadd.f32 %v2203, %v2385
      %v2436 = vadd.f32 %v2204, %v2387
      %v2437 = vadd.f32 %v2205, %v2390
      %v2438 = vadd.f32 %v2206, %v2392
      %v2439 = vadd.f32 %v2207, %v2395
      %v2440 = vadd.f32 %v2208, %v2397
      %v2441 = vadd.f32 %v2209, %v2400
      %v2442 = vadd.f32 %v2210, %v2402
      %v2443 = vadd.f32 %v2211, %v2405
      %v2444 = vadd.f32 %v2212, %v2407
      %v2445 = vld [vmem:[%s278] sm:$0x1]
      %v2447 = vperm.slane %v2445, 0
      %v2449 = vmul.f32 %v2409, %v2447
      %v2450 = vmul.f32 %v2410, %v2447
      %v2451 = vmul.f32 %v2411, %v2447
      %v2452 = vmul.f32 %v2412, %v2447
      %v2453 = vmul.f32 %v2413, %v2447
      %v2454 = vmul.f32 %v2414, %v2447
      %v2455 = vmul.f32 %v2415, %v2447
      %v2456 = vmul.f32 %v2416, %v2447
      %v2457 = vmul.f32 %v2417, %v2447
      %v2458 = vmul.f32 %v2418, %v2447
      %v2459 = vmul.f32 %v2419, %v2447
      %v2460 = vmul.f32 %v2420, %v2447
      %v2461 = vmul.f32 %v2421, %v2447
      %v2462 = vmul.f32 %v2422, %v2447
      %v2463 = vmul.f32 %v2423, %v2447
      %v2464 = vmul.f32 %v2424, %v2447
      %v2465 = vmul.f32 %v2425, %v2447
      %v2466 = vmul.f32 %v2426, %v2447
      %v2467 = vmul.f32 %v2427, %v2447
      %v2468 = vmul.f32 %v2428, %v2447
      %v2469 = vmul.f32 %v2429, %v2447
      %v2470 = vmul.f32 %v2430, %v2447
      %v2471 = vmul.f32 %v2431, %v2447
      %v2472 = vmul.f32 %v2432, %v2447
      %v2473 = vmul.f32 %v2433, %v2447
      %v2474 = vmul.f32 %v2434, %v2447
      %v2475 = vmul.f32 %v2435, %v2447
      %v2476 = vmul.f32 %v2436, %v2447
      %v2477 = vmul.f32 %v2437, %v2447
      %v2478 = vmul.f32 %v2438, %v2447
      %v2479 = vmul.f32 %v2439, %v2447
      %v2480 = vmul.f32 %v2440, %v2447
      %v2481 = vmul.f32 %v2441, %v2447
      %v2482 = vmul.f32 %v2442, %v2447
      %v2483 = vmul.f32 %v2443, %v2447
      %v2484 = vmul.f32 %v2444, %v2447
      %v2485 = vld [vmem:[%s281] sm:$0x1]
      %v2487 = vperm.slane %v2485, 0
      %v2489 = vadd.f32 %v2449, %v2487
      %v2490 = vadd.f32 %v2450, %v2487
      %v2491 = vadd.f32 %v2451, %v2487
      %v2492 = vadd.f32 %v2452, %v2487
      %v2493 = vadd.f32 %v2453, %v2487
      %v2494 = vadd.f32 %v2454, %v2487
      %v2495 = vadd.f32 %v2455, %v2487
      %v2496 = vadd.f32 %v2456, %v2487
      %v2497 = vadd.f32 %v2457, %v2487
      %v2498 = vadd.f32 %v2458, %v2487
      %v2499 = vadd.f32 %v2459, %v2487
      %v2500 = vadd.f32 %v2460, %v2487
      %v2501 = vadd.f32 %v2461, %v2487
      %v2502 = vadd.f32 %v2462, %v2487
      %v2503 = vadd.f32 %v2463, %v2487
      %v2504 = vadd.f32 %v2464, %v2487
      %v2505 = vadd.f32 %v2465, %v2487
      %v2506 = vadd.f32 %v2466, %v2487
      %v2507 = vadd.f32 %v2467, %v2487
      %v2508 = vadd.f32 %v2468, %v2487
      %v2509 = vadd.f32 %v2469, %v2487
      %v2510 = vadd.f32 %v2470, %v2487
      %v2511 = vadd.f32 %v2471, %v2487
      %v2512 = vadd.f32 %v2472, %v2487
      %v2513 = vadd.f32 %v2473, %v2487
      %v2514 = vadd.f32 %v2474, %v2487
      %v2515 = vadd.f32 %v2475, %v2487
      %v2516 = vadd.f32 %v2476, %v2487
      %v2517 = vadd.f32 %v2477, %v2487
      %v2518 = vadd.f32 %v2478, %v2487
      %v2519 = vadd.f32 %v2479, %v2487
      %v2520 = vadd.f32 %v2480, %v2487
      %v2521 = vadd.f32 %v2481, %v2487
      %v2522 = vadd.f32 %v2482, %v2487
      %v2523 = vadd.f32 %v2483, %v2487
      %v2524 = vadd.f32 %v2484, %v2487
      %v2525 = vmax.f32 %v2489, 0.0
      %v2526 = vmax.f32 %v2490, 0.0
      %v2527 = vmax.f32 %v2491, 0.0
      %v2528 = vmax.f32 %v2492, 0.0
      %v2529 = vmax.f32 %v2493, 0.0
      %v2530 = vmax.f32 %v2494, 0.0
      %v2531 = vmax.f32 %v2495, 0.0
      %v2532 = vmax.f32 %v2496, 0.0
      %v2533 = vmax.f32 %v2497, 0.0
      %v2534 = vmax.f32 %v2498, 0.0
      %v2535 = vmax.f32 %v2499, 0.0
      %v2536 = vmax.f32 %v2500, 0.0
      %v2537 = vmax.f32 %v2501, 0.0
      %v2538 = vmax.f32 %v2502, 0.0
      %v2539 = vmax.f32 %v2503, 0.0
      %v2540 = vmax.f32 %v2504, 0.0
      %v2541 = vmax.f32 %v2505, 0.0
      %v2542 = vmax.f32 %v2506, 0.0
      %v2543 = vmax.f32 %v2507, 0.0
      %v2544 = vmax.f32 %v2508, 0.0
      %v2545 = vmax.f32 %v2509, 0.0
      %v2546 = vmax.f32 %v2510, 0.0
      %v2547 = vmax.f32 %v2511, 0.0
      %v2548 = vmax.f32 %v2512, 0.0
      %v2549 = vmax.f32 %v2513, 0.0
      %v2550 = vmax.f32 %v2514, 0.0
      %v2551 = vmax.f32 %v2515, 0.0
      %v2552 = vmax.f32 %v2516, 0.0
      %v2553 = vmax.f32 %v2517, 0.0
      %v2554 = vmax.f32 %v2518, 0.0
      %v2555 = vmax.f32 %v2519, 0.0
      %v2556 = vmax.f32 %v2520, 0.0
      %v2557 = vmax.f32 %v2521, 0.0
      %v2558 = vmax.f32 %v2522, 0.0
      %v2559 = vmax.f32 %v2523, 0.0
      %v2560 = vmax.f32 %v2524, 0.0
      %2561 = vst [vmem:[%s293] sm:$0xff] %v2525
      %2562 = vst [vmem:[%s293 + $0x8] sm:$0xff] %v2526
      %2563 = vst [vmem:[%s293 + $0x10] sm:$0xff] %v2527
      %2564 = vst [vmem:[%s293 + $0x18] sm:$0xff] %v2528
      %2565 = vst [vmem:[%s293 + $0x20] sm:$0xff] %v2529
      %2566 = vst [vmem:[%s293 + $0x28] sm:$0xff] %v2530
      %2567 = vst [vmem:[%s293 + $0x30] sm:$0xff] %v2531
      %2568 = vst [vmem:[%s293 + $0x38] sm:$0xff] %v2532
      %2569 = vst [vmem:[%s293 + $0x40] sm:$0xff] %v2533
      %2570 = vst [vmem:[%s293 + $0x48] sm:$0xff] %v2534
      %2571 = vst [vmem:[%s293 + $0x50] sm:$0xff] %v2535
      %2572 = vst [vmem:[%s293 + $0x58] sm:$0xff] %v2536
      %2573 = vst [vmem:[%s293 + $0x60] sm:$0xff] %v2537
      %2574 = vst [vmem:[%s293 + $0x68] sm:$0xff] %v2538
      %2575 = vst [vmem:[%s293 + $0x70] sm:$0xff] %v2539
      %2576 = vst [vmem:[%s293 + $0x78] sm:$0xff] %v2540
      %2577 = vst [vmem:[%s293 + $0x80] sm:$0xff] %v2541
      %2578 = vst [vmem:[%s293 + $0x88] sm:$0xff] %v2542
      %2579 = vst [vmem:[%s293 + $0x90] sm:$0xff] %v2543
      %2580 = vst [vmem:[%s293 + $0x98] sm:$0xff] %v2544
      %2581 = vst [vmem:[%s293 + $0xa0] sm:$0xff] %v2545
      %2582 = vst [vmem:[%s293 + $0xa8] sm:$0xff] %v2546
      %2583 = vst [vmem:[%s293 + $0xb0] sm:$0xff] %v2547
      %2584 = vst [vmem:[%s293 + $0xb8] sm:$0xff] %v2548
      %2585 = vst [vmem:[%s293 + $0xc0] sm:$0xff] %v2549
      %2586 = vst [vmem:[%s293 + $0xc8] sm:$0xff] %v2550
      %2587 = vst [vmem:[%s293 + $0xd0] sm:$0xff] %v2551
      %2588 = vst [vmem:[%s293 + $0xd8] sm:$0xff] %v2552
      %2589 = vst [vmem:[%s293 + $0xe0] sm:$0xff] %v2553
      %2590 = vst [vmem:[%s293 + $0xe8] sm:$0xff] %v2554
      %2591 = vst [vmem:[%s293 + $0xf0] sm:$0xff] %v2555
      %2592 = vst [vmem:[%s293 + $0xf8] sm:$0xff] %v2556
      %2593 = vst [vmem:[%s293 + $0x100] sm:$0xff] %v2557
      %2594 = vst [vmem:[%s293 + $0x108] sm:$0xff] %v2558
      %2595 = vst [vmem:[%s293 + $0x110] sm:$0xff] %v2559
      %2596 = vst [vmem:[%s293 + $0x118] sm:$0xff] %v2560
      %p2597 = scmp.lt.s32.totalorder %s20, 1
      %s2598 = scalar_select %p2597, %s20, 1
      %p2599 = scmp.lt.s32.totalorder %s22, 0
      %s2600 = scalar_select %p2599, %s22, 0
      %p2601 = scmp.lt.s32.totalorder %s21, 0
      %s2602 = scalar_select %p2601, %s21, 0
      %s2603 = smul.addr %s2600, 36
      %s2604 = sadd.s32 %s2602, %s2603
      %s2605 = smul.addr %s2598, 36
      %s2606 = sadd.s32 %s2604, %s2605
      %s2607 = smul.addr %s2606, 8
      %s2608 = scalar_lea.vmem %s4, %s2607
      // Predicated region
      $region37: #{conv_norm_act.1} parent=35 // pred_check
        %p2609 = pneg %p162
      $region38: #{conv_norm_act.1} parent=35 // pred_check_branch
        %2611 = sbr.rel (%p2609) target = $region40
      $region39: #{conv_norm_act.1} parent=35 // pred_region
        _
      $region40: #{conv_norm_act.1} parent=35 // pred_fallthru
        _
    $region36: #{conv_norm_act.1} parent=5 // pred_fallthru
      _
    %p2612 = scmp.le.s32.totalorder 2, %s10
    // Predicated region
    $region41: #{conv_norm_act.1} parent=5 // pred_check
      %p2613 = pneg %p2612
    $region42: #{conv_norm_act.1} parent=5 // pred_check_branch
      %2615 = sbr.rel (%p2613) target = $region44
    $region43: #{conv_norm_act.1} parent=5 // pred_region
      %s2616 = ssub.s32 %s10, 2
      // Predicated region
      $region45: #{conv_norm_act.1} parent=43 // pred_check
        %p2617 = pneg %p168
      $region46: #{conv_norm_act.1} parent=43 // pred_check_branch
        %2619 = sbr.rel (%p2617) target = $region48
      $region47: #{conv_norm_act.1} parent=43 // pred_region
        %p2620 = scmp.lt.s32.totalorder %s23, 1
        %s2621 = scalar_select %p2620, %s23, 1
        %p2622 = scmp.lt.s32.totalorder %s25, 0
        %s2623 = scalar_select %p2622, %s25, 0
        %p2624 = scmp.lt.s32.totalorder %s24, 0
        %s2625 = scalar_select %p2624, %s24, 0
        %s2626 = smul.addr %s2623, 36
        %s2627 = sadd.s32 %s2625, %s2626
        %s2628 = smul.addr %s2621, 36
        %s2629 = sadd.s32 %s2627, %s2628
        %s2630 = smul.addr %s2629, 8
        %s2631 = scalar_lea.vmem %s4, %s2630
      $region48: #{conv_norm_act.1} parent=43 // pred_fallthru
        _
    $region44: #{conv_norm_act.1} parent=5 // pred_fallthru
      _
  $region6: #{conv_norm_act.1} parent=0 // loop_footer
    %s14 = sadd.s32 1, %s10
  $region7: #{conv_norm_act.1} parent=0 // loop_footer_branch
    %9 = sbr.rel target = $region3
  $region8: #{conv_norm_act.1} parent=0 // loop_exit
    _

</llo_original>
